<compile_context>
chip_gen: v5e
topology: v5e:2x2
jax: 0.10.0
libtpu: 0.0.40
codegen_flags: <defaults>
</compile_context>

<pallas_src>
import jax
import jax.numpy as jnp
from jax.experimental import pallas as pl
from jax.experimental.pallas import tpu as pltpu

# ---- model hyper-parameters (small, consistent with the module) -------------
BATCH = 2
SEQ = 8
EMB = 128          # Embedding_Size
NUM_HEAD = 4       # Num_Head
DIM_K = 32         # Dim_K  (NUM_HEAD * DIM_K == EMB)
DIM_V = 32         # Dim_V
MID = 1024         # Mid_Size (hard-coded to 1024 in Encoder_Layer.__init__)
LN_EPS = 1e-5


def _layer_norm(y, gamma, beta):
    mean = jnp.mean(y, axis=-1, keepdims=True)
    var = jnp.mean((y - mean) ** 2, axis=-1, keepdims=True)
    return (y - mean) * jax.lax.rsqrt(var + LN_EPS) * gamma + beta


def encoder_layer_kernel(
    # inputs
    x_ref, mask_ref,
    wqkv_ref, bqkv_ref, wo_ref, bo_ref, ln1g_ref, ln1b_ref,
    b1_ref, b2_ref, ln2g_ref, ln2b_ref,
    w1_hbm_ref, w2_hbm_ref,
    # outputs
    out_ref, attn_ref,
    # scratch
    w1_vmem, w2_vmem, dma_sems,
):
    bs = BATCH * SEQ

    # ---- kick off the FFN-weight DMAs first: they overlap QKV + attention ----
    w1_copy = pltpu.make_async_copy(w1_hbm_ref, w1_vmem, dma_sems.at[0])
    w2_copy = pltpu.make_async_copy(w2_hbm_ref, w2_vmem, dma_sems.at[1])
    w1_copy.start()
    w2_copy.start()

    x = x_ref[...]                                   # (B*S, E) f32
    x_bf = x.astype(jnp.bfloat16)

    # ---- fused QKV projection: one bf16 MXU matmul, f32 accumulation ---------
    qkv = jnp.dot(x_bf, wqkv_ref[...],
                  preferred_element_type=jnp.float32) + bqkv_ref[...]
    inv_scale = jnp.float32(1.0 / (DIM_K ** 0.5))
    q = (qkv[:, 0 * EMB:1 * EMB] * inv_scale).astype(jnp.bfloat16)  # scale folded once
    k = qkv[:, 1 * EMB:2 * EMB].astype(jnp.bfloat16)
    v = qkv[:, 2 * EMB:3 * EMB].astype(jnp.bfloat16)

    # additive mask bias, computed once (hoisted out of any head loop)
    bias = jnp.where(mask_ref[...] == 0,
                     jnp.float32(-1e9), jnp.float32(0.0))           # (B, S, S)

    # ---- per-head Q.K^T (MXU work stays a short unrolled loop); raw scores
    #      are staged in the attention-weights output buffer so the softmax
    #      runs ONCE over all heads ------------------------------------------
    # TODO(synk): a single dot_general batched over (b, h) would need a
    # lane-splitting reshape of q/k/v; kept per-head for robust lowering.
    for h in range(NUM_HEAD):
        qh = q[:, h * DIM_K:(h + 1) * DIM_K].reshape(BATCH, SEQ, DIM_K)
        kh = k[:, h * DIM_K:(h + 1) * DIM_K].reshape(BATCH, SEQ, DIM_K)
        attn_ref[h] = jnp.einsum("bqd,bkd->bqk", qh, kh,
                                 preferred_element_type=jnp.float32)

    # ---- batched softmax over all heads (one bias add / max / exp / sum /
    #      reciprocal instead of one per head) --------------------------------
    s = attn_ref[...] + bias                                        # (H,B,S,S)
    s = s - jnp.max(s, axis=-1, keepdims=True)
    e = jnp.exp(s)
    w = e * pl.reciprocal(jnp.sum(e, axis=-1, keepdims=True), approx=True)
    attn_ref[...] = w                                               # single store
    w_bf = w.astype(jnp.bfloat16)

    # ---- per-head context, projected by Wout slice and accumulated into a
    #      lane-dense (B*S, E) f32 slab (no masked 32-lane scratch stores) -----
    attn_out = bo_ref[...]                                          # (1, E), broadcasts
    for h in range(NUM_HEAD):
        vh = v[:, h * DIM_V:(h + 1) * DIM_V].reshape(BATCH, SEQ, DIM_V)
        ctx_h = jnp.einsum("bqk,bkd->bqd", w_bf[h], vh,
                           preferred_element_type=jnp.float32)       # (B,S,Dv)
        ctx_h = ctx_h.reshape(bs, DIM_V).astype(jnp.bfloat16)
        attn_out = attn_out + jnp.dot(
            ctx_h, wo_ref[h * DIM_V:(h + 1) * DIM_V, :],
            preferred_element_type=jnp.float32)

    # ---- residual + LayerNorm -------------------------------------------------
    y = _layer_norm(x + attn_out, ln1g_ref[...], ln1b_ref[...])

    # ---- feed-forward (wait on each prefetched weight only when needed) -------
    w1_copy.wait()
    h1 = jnp.dot(y.astype(jnp.bfloat16), w1_vmem[...],
                 preferred_element_type=jnp.float32) + b1_ref[...]
    h1 = jnp.maximum(h1, 0.0)
    w2_copy.wait()
    h2 = jnp.dot(h1.astype(jnp.bfloat16), w2_vmem[...],
                 preferred_element_type=jnp.float32) + b2_ref[...]
    out_ref[...] = _layer_norm(y + h2, ln2g_ref[...], ln2b_ref[...])


def prepare_params(params):
    """One-time (outside the per-call jitted path): fuse QKV weights and cast
    the matmul weights to bf16 for native-MXU operands / halved HBM bytes."""
    wqkv = jnp.concatenate([params["wq"], params["wk"], params["wv"]], axis=1)
    bqkv = jnp.concatenate([params["bq"], params["bk"], params["bv"]], axis=1)
    return {
        "wqkv": wqkv.astype(jnp.bfloat16),
        "bqkv": bqkv,
        "wo": params["wo"].astype(jnp.bfloat16),
        "bo": params["bo"],
        "ln1g": params["ln1g"], "ln1b": params["ln1b"],
        "w1": params["w1"].astype(jnp.bfloat16), "b1": params["b1"],
        "w2": params["w2"].astype(jnp.bfloat16), "b2": params["b2"],
        "ln2g": params["ln2g"], "ln2b": params["ln2b"],
    }


@jax.jit
def encoder_layer(x, mask, prep):
    """x: (B,S,E) f32, mask: (B,S,S) int32 (0 = masked), prep: prepared params."""
    B, S, E = x.shape
    H = NUM_HEAD

    x2 = x.reshape(B * S, E)

    args = (x2, mask,
            prep["wqkv"], prep["bqkv"], prep["wo"], prep["bo"],
            prep["ln1g"], prep["ln1b"],
            prep["b1"], prep["b2"], prep["ln2g"], prep["ln2b"],
            prep["w1"], prep["w2"])

    out_shapes = (
        jax.ShapeDtypeStruct((B * S, E), jnp.float32),     # lane-dense main output
        jax.ShapeDtypeStruct((H, B, S, S), jnp.float32),   # per-head attn weights
    )

    vmem = pltpu.MemorySpace.VMEM
    in_specs = ([pl.BlockSpec(memory_space=vmem)] * 12
                + [pl.BlockSpec(memory_space=pl.ANY)] * 2)   # w1, w2: manual DMA
    out_specs = (pl.BlockSpec(memory_space=vmem),
                 pl.BlockSpec(memory_space=vmem))

    flops = (2 * B * S * E * (3 * E)          # fused QKV projection
             + 4 * B * H * S * S * DIM_K      # scores + attn @ V
             + 2 * B * S * E * E              # output projection
             + 4 * B * S * E * MID)           # FFN (two matmuls)
    bytes_accessed = int(sum(a.size * a.dtype.itemsize for a in args)
                         + 4 * (B * S * E + H * B * S * S))
    transcendentals = H * B * S * S + 4 * B * S

    out2, attn_h = pl.pallas_call(
        encoder_layer_kernel,
        out_shape=out_shapes,
        in_specs=in_specs,
        out_specs=out_specs,
        scratch_shapes=[
            pltpu.VMEM((EMB, MID), jnp.bfloat16),      # prefetched w1
            pltpu.VMEM((MID, EMB), jnp.bfloat16),      # prefetched w2
            pltpu.SemaphoreType.DMA((2,)),
        ],
        compiler_params=pltpu.CompilerParams(
            vmem_limit_bytes=32 * 1024 * 1024),
        cost_estimate=pl.CostEstimate(
            flops=flops,
            transcendentals=transcendentals,
            bytes_accessed=bytes_accessed),
    )(*args)

    return out2.reshape(B, S, E), jnp.transpose(attn_h, (1, 0, 2, 3))


# ---- pure-JAX reference (mirrors the PyTorch forward, eval mode, f32) --------
def encoder_layer_ref(x, mask, params):
    B, S, E = x.shape
    q = x @ params["wq"] + params["bq"]
    k = x @ params["wk"] + params["bk"]
    v = x @ params["wv"] + params["bv"]
    q = q.reshape(B, S, NUM_HEAD, DIM_K).transpose(0, 2, 1, 3)
    k = k.reshape(B, S, NUM_HEAD, DIM_K).transpose(0, 2, 1, 3)
    v = v.reshape(B, S, NUM_HEAD, DIM_V).transpose(0, 2, 1, 3)
    s = jnp.einsum("bhqd,bhkd->bhqk", q, k) / jnp.sqrt(jnp.float32(DIM_K))
    s = jnp.where(mask[:, None, :, :] == 0, -1e9, s)
    w = jax.nn.softmax(s, axis=-1)
    ctx = jnp.einsum("bhqk,bhkd->bhqd", w, v)
    ctx = ctx.transpose(0, 2, 1, 3).reshape(B, S, NUM_HEAD * DIM_V)
    attn_out = ctx @ params["wo"] + params["bo"]
    y = _layer_norm(x + attn_out, params["ln1g"], params["ln1b"])
    h1 = jax.nn.relu(y @ params["w1"] + params["b1"])
    h2 = h1 @ params["w2"] + params["b2"]
    out = _layer_norm(y + h2, params["ln2g"], params["ln2b"])
    return out, w


def init_params(key):
    ks = jax.random.split(key, 8)
    sc = 0.05
    p = {
        "wq": sc * jax.random.normal(ks[0], (EMB, NUM_HEAD * DIM_K), jnp.float32),
        "bq": sc * jax.random.normal(ks[1], (1, NUM_HEAD * DIM_K), jnp.float32),
        "wk": sc * jax.random.normal(ks[2], (EMB, NUM_HEAD * DIM_K), jnp.float32),
        "bk": jnp.zeros((1, NUM_HEAD * DIM_K), jnp.float32),
        "wv": sc * jax.random.normal(ks[3], (EMB, NUM_HEAD * DIM_V), jnp.float32),
        "bv": jnp.zeros((1, NUM_HEAD * DIM_V), jnp.float32),
        "wo": sc * jax.random.normal(ks[4], (NUM_HEAD * DIM_V, EMB), jnp.float32),
        "bo": sc * jax.random.normal(ks[5], (1, EMB), jnp.float32),
        "ln1g": jnp.ones((1, EMB), jnp.float32),
        "ln1b": jnp.zeros((1, EMB), jnp.float32),
        "w1": sc * jax.random.normal(ks[6], (EMB, MID), jnp.float32),
        "b1": jnp.zeros((1, MID), jnp.float32),
        "w2": sc * jax.random.normal(ks[7], (MID, EMB), jnp.float32),
        "b2": jnp.zeros((1, EMB), jnp.float32),
        "ln2g": jnp.ones((1, EMB), jnp.float32),
        "ln2b": jnp.zeros((1, EMB), jnp.float32),
    }
    return p


if __name__ == "__main__":
    key = jax.random.PRNGKey(0)
    k_x, k_m, k_p = jax.random.split(key, 3)

    x = jax.random.normal(k_x, (BATCH, SEQ, EMB), jnp.float32)
    # random 0/1 mask with at least the diagonal visible
    mask = (jax.random.uniform(k_m, (BATCH, SEQ, SEQ)) > 0.3).astype(jnp.int32)
    mask = jnp.maximum(mask, jnp.eye(SEQ, dtype=jnp.int32)[None])
    params = init_params(k_p)
    prep = prepare_params(params)     # one-time fuse + bf16 cast (not per-call)

    out, attn = encoder_layer(x, mask, prep)
    out = jax.block_until_ready(out)
    attn = jax.block_until_ready(attn)

    ref_out, ref_attn = encoder_layer_ref(x, mask, params)
    # bf16 MXU operands (f32 accumulation) => relaxed tolerances vs f32 reference
    assert jnp.allclose(out, ref_out, atol=5e-2, rtol=5e-2), "output mismatch"
    assert jnp.allclose(attn, ref_attn, atol=1e-2, rtol=1e-2), "attn mismatch"

    print("KERNEL_OK")
</pallas_src>

<mosaic_0001>
module attributes {stable_mosaic.version = 11 : i64} {
  func.func @encoder_layer_kernel(%arg0: memref<16x128xf32, #tpu.memory_space<vmem>>, %arg1: memref<2x8x8xi32, #tpu.memory_space<vmem>>, %arg2: memref<128x384xbf16, #tpu.memory_space<vmem>>, %arg3: memref<1x384xf32, #tpu.memory_space<vmem>>, %arg4: memref<128x128xbf16, #tpu.memory_space<vmem>>, %arg5: memref<1x128xf32, #tpu.memory_space<vmem>>, %arg6: memref<1x128xf32, #tpu.memory_space<vmem>>, %arg7: memref<1x128xf32, #tpu.memory_space<vmem>>, %arg8: memref<1x1024xf32, #tpu.memory_space<vmem>>, %arg9: memref<1x128xf32, #tpu.memory_space<vmem>>, %arg10: memref<1x128xf32, #tpu.memory_space<vmem>>, %arg11: memref<1x128xf32, #tpu.memory_space<vmem>>, %arg12: memref<128x1024xbf16, #tpu.memory_space<any>>, %arg13: memref<1024x128xbf16, #tpu.memory_space<any>>, %arg14: memref<16x128xf32, #tpu.memory_space<vmem>>, %arg15: memref<4x2x8x8xf32, #tpu.memory_space<vmem>>, %arg16: memref<128x1024xbf16, #tpu.memory_space<vmem>>, %arg17: memref<1024x128xbf16, #tpu.memory_space<vmem>>, %arg18: memref<2x!tpu.dma_semaphore, #tpu.memory_space<semaphore_mem>>) attributes {dimension_semantics = [], scalar_prefetch = 0 : i64, scratch_operands = 3 : i64, tpu.core_type = #tpu.core_type<tc>} {
    %c0_i32 = arith.constant 0 : i32
    %0 = tpu.memref_slice %arg18[%c0_i32] : memref<2x!tpu.dma_semaphore, #tpu.memory_space<semaphore_mem>> -> memref<1x!tpu.dma_semaphore, #tpu.memory_space<semaphore_mem>>
    %1 = tpu.memref_squeeze %0 : memref<1x!tpu.dma_semaphore, #tpu.memory_space<semaphore_mem>> -> memref<!tpu.dma_semaphore, #tpu.memory_space<semaphore_mem>>
    tpu.enqueue_dma source(%arg12 : memref<128x1024xbf16, #tpu.memory_space<any>>) target(%arg16 : memref<128x1024xbf16, #tpu.memory_space<vmem>>) target_semaphore(%1 : memref<!tpu.dma_semaphore, #tpu.memory_space<semaphore_mem>>)
    %c1_i32 = arith.constant 1 : i32
    %2 = tpu.memref_slice %arg18[%c1_i32] : memref<2x!tpu.dma_semaphore, #tpu.memory_space<semaphore_mem>> -> memref<1x!tpu.dma_semaphore, #tpu.memory_space<semaphore_mem>>
    %3 = tpu.memref_squeeze %2 : memref<1x!tpu.dma_semaphore, #tpu.memory_space<semaphore_mem>> -> memref<!tpu.dma_semaphore, #tpu.memory_space<semaphore_mem>>
    tpu.enqueue_dma source(%arg13 : memref<1024x128xbf16, #tpu.memory_space<any>>) target(%arg17 : memref<1024x128xbf16, #tpu.memory_space<vmem>>) target_semaphore(%3 : memref<!tpu.dma_semaphore, #tpu.memory_space<semaphore_mem>>)
    %c0 = arith.constant 0 : index
    %c0_0 = arith.constant 0 : index
    %4 = vector.load %arg0[%c0, %c0_0] : memref<16x128xf32, #tpu.memory_space<vmem>>, vector<16x128xf32>
    %5 = arith.truncf %4 : vector<16x128xf32> to vector<16x128xbf16>
    %c0_1 = arith.constant 0 : index
    %c0_2 = arith.constant 0 : index
    %6 = vector.load %arg2[%c0_1, %c0_2] : memref<128x384xbf16, #tpu.memory_space<vmem>>, vector<128x384xbf16>
    %cst = arith.constant dense<0.000000e+00> : vector<16x384xf32>
    %7 = tpu.matmul %5, %6, %cst {dimension_numbers = #tpu.dot_dimension_numbers<[1], [0], [0], [1], [0, 0, 1, 1], [], []>} : vector<16x128xbf16>, vector<128x384xbf16>, vector<16x384xf32> -> vector<16x384xf32>
    %c0_3 = arith.constant 0 : index
    %c0_4 = arith.constant 0 : index
    %8 = vector.load %arg3[%c0_3, %c0_4] : memref<1x384xf32, #tpu.memory_space<vmem>>, vector<1x384xf32>
    %9 = vector.broadcast %8 : vector<1x384xf32> to vector<16x384xf32>
    %10 = arith.addf %7, %9 : vector<16x384xf32>
    %11 = vector.extract_strided_slice %10 {offsets = [0, 0], sizes = [16, 128], strides = [1, 1]} : vector<16x384xf32> to vector<16x128xf32>
    %cst_5 = arith.constant 0.176776692 : f32
    %12 = vector.broadcast %cst_5 : f32 to vector<16x128xf32>
    %13 = arith.mulf %11, %12 : vector<16x128xf32>
    %14 = arith.truncf %13 : vector<16x128xf32> to vector<16x128xbf16>
    %15 = vector.extract_strided_slice %10 {offsets = [0, 128], sizes = [16, 128], strides = [1, 1]} : vector<16x384xf32> to vector<16x128xf32>
    %16 = arith.truncf %15 : vector<16x128xf32> to vector<16x128xbf16>
    %17 = vector.extract_strided_slice %10 {offsets = [0, 256], sizes = [16, 128], strides = [1, 1]} : vector<16x384xf32> to vector<16x128xf32>
    %18 = arith.truncf %17 : vector<16x128xf32> to vector<16x128xbf16>
    %c0_6 = arith.constant 0 : index
    %c0_7 = arith.constant 0 : index
    %c0_8 = arith.constant 0 : index
    %19 = vector.load %arg1[%c0_6, %c0_7, %c0_8] : memref<2x8x8xi32, #tpu.memory_space<vmem>>, vector<2x8x8xi32>
    %c0_i32_9 = arith.constant 0 : i32
    %20 = vector.broadcast %c0_i32_9 : i32 to vector<2x8x8xi32>
    %21 = arith.cmpi eq, %19, %20 : vector<2x8x8xi32>
    %cst_10 = arith.constant -1.000000e+09 : f32
    %cst_11 = arith.constant 0.000000e+00 : f32
    %22 = vector.broadcast %cst_10 : f32 to vector<2x8x8xf32>
    %23 = vector.broadcast %cst_11 : f32 to vector<2x8x8xf32>
    %24 = arith.select %21, %22, %23 : vector<2x8x8xi1>, vector<2x8x8xf32>
    %25 = vector.extract_strided_slice %14 {offsets = [0, 0], sizes = [16, 32], strides = [1, 1]} : vector<16x128xbf16> to vector<16x32xbf16>
    %26 = vector.shape_cast %25 : vector<16x32xbf16> to vector<2x8x32xbf16>
    %27 = vector.extract_strided_slice %16 {offsets = [0, 0], sizes = [16, 32], strides = [1, 1]} : vector<16x128xbf16> to vector<16x32xbf16>
    %28 = vector.shape_cast %27 : vector<16x32xbf16> to vector<2x8x32xbf16>
    "tpu.trace_start"() <{level = 10 : i32, message = "bqd,bkd->bqk"}> : () -> ()
    %cst_12 = arith.constant dense<0.000000e+00> : vector<2x8x8xf32>
    %29 = tpu.matmul %26, %28, %cst_12 {dimension_numbers = #tpu.dot_dimension_numbers<[2], [2], [1], [1], [0, 0, 0, 1, 1, 1], [0], [0]>} : vector<2x8x32xbf16>, vector<2x8x32xbf16>, vector<2x8x8xf32> -> vector<2x8x8xf32>
    "tpu.trace_stop"() : () -> ()
    %c0_13 = arith.constant 0 : index
    %c0_14 = arith.constant 0 : index
    %c0_15 = arith.constant 0 : index
    %c0_16 = arith.constant 0 : index
    %30 = vector.load %arg15[%c0_13, %c0_14, %c0_15, %c0_16] : memref<4x2x8x8xf32, #tpu.memory_space<vmem>>, vector<1x2x8x8xf32>
    %31 = vector.shape_cast %30 : vector<1x2x8x8xf32> to vector<2x8x8xf32>
    %32 = vector.shape_cast %29 : vector<2x8x8xf32> to vector<1x2x8x8xf32>
    tpu.vector_store %arg15[%c0_13, %c0_14, %c0_15, %c0_16], %32 {strides = array<i32>} : memref<4x2x8x8xf32, #tpu.memory_space<vmem>>, vector<1x2x8x8xf32>,
    %33 = vector.extract_strided_slice %14 {offsets = [0, 32], sizes = [16, 32], strides = [1, 1]} : vector<16x128xbf16> to vector<16x32xbf16>
    %34 = vector.shape_cast %33 : vector<16x32xbf16> to vector<2x8x32xbf16>
    %35 = vector.extract_strided_slice %16 {offsets = [0, 32], sizes = [16, 32], strides = [1, 1]} : vector<16x128xbf16> to vector<16x32xbf16>
    %36 = vector.shape_cast %35 : vector<16x32xbf16> to vector<2x8x32xbf16>
    "tpu.trace_start"() <{level = 10 : i32, message = "bqd,bkd->bqk"}> : () -> ()
    %cst_17 = arith.constant dense<0.000000e+00> : vector<2x8x8xf32>
    %37 = tpu.matmul %34, %36, %cst_17 {dimension_numbers = #tpu.dot_dimension_numbers<[2], [2], [1], [1], [0, 0, 0, 1, 1, 1], [0], [0]>} : vector<2x8x32xbf16>, vector<2x8x32xbf16>, vector<2x8x8xf32> -> vector<2x8x8xf32>
    "tpu.trace_stop"() : () -> ()
    %c1 = arith.constant 1 : index
    %c0_18 = arith.constant 0 : index
    %c0_19 = arith.constant 0 : index
    %c0_20 = arith.constant 0 : index
    %38 = vector.load %arg15[%c1, %c0_18, %c0_19, %c0_20] : memref<4x2x8x8xf32, #tpu.memory_space<vmem>>, vector<1x2x8x8xf32>
    %39 = vector.shape_cast %38 : vector<1x2x8x8xf32> to vector<2x8x8xf32>
    %40 = vector.shape_cast %37 : vector<2x8x8xf32> to vector<1x2x8x8xf32>
    tpu.vector_store %arg15[%c1, %c0_18, %c0_19, %c0_20], %40 {strides = array<i32>} : memref<4x2x8x8xf32, #tpu.memory_space<vmem>>, vector<1x2x8x8xf32>,
    %41 = vector.extract_strided_slice %14 {offsets = [0, 64], sizes = [16, 32], strides = [1, 1]} : vector<16x128xbf16> to vector<16x32xbf16>
    %42 = vector.shape_cast %41 : vector<16x32xbf16> to vector<2x8x32xbf16>
    %43 = vector.extract_strided_slice %16 {offsets = [0, 64], sizes = [16, 32], strides = [1, 1]} : vector<16x128xbf16> to vector<16x32xbf16>
    %44 = vector.shape_cast %43 : vector<16x32xbf16> to vector<2x8x32xbf16>
    "tpu.trace_start"() <{level = 10 : i32, message = "bqd,bkd->bqk"}> : () -> ()
    %cst_21 = arith.constant dense<0.000000e+00> : vector<2x8x8xf32>
    %45 = tpu.matmul %42, %44, %cst_21 {dimension_numbers = #tpu.dot_dimension_numbers<[2], [2], [1], [1], [0, 0, 0, 1, 1, 1], [0], [0]>} : vector<2x8x32xbf16>, vector<2x8x32xbf16>, vector<2x8x8xf32> -> vector<2x8x8xf32>
    "tpu.trace_stop"() : () -> ()
    %c2 = arith.constant 2 : index
    %c0_22 = arith.constant 0 : index
    %c0_23 = arith.constant 0 : index
    %c0_24 = arith.constant 0 : index
    %46 = vector.load %arg15[%c2, %c0_22, %c0_23, %c0_24] : memref<4x2x8x8xf32, #tpu.memory_space<vmem>>, vector<1x2x8x8xf32>
    %47 = vector.shape_cast %46 : vector<1x2x8x8xf32> to vector<2x8x8xf32>
    %48 = vector.shape_cast %45 : vector<2x8x8xf32> to vector<1x2x8x8xf32>
    tpu.vector_store %arg15[%c2, %c0_22, %c0_23, %c0_24], %48 {strides = array<i32>} : memref<4x2x8x8xf32, #tpu.memory_space<vmem>>, vector<1x2x8x8xf32>,
    %49 = vector.extract_strided_slice %14 {offsets = [0, 96], sizes = [16, 32], strides = [1, 1]} : vector<16x128xbf16> to vector<16x32xbf16>
    %50 = vector.shape_cast %49 : vector<16x32xbf16> to vector<2x8x32xbf16>
    %51 = vector.extract_strided_slice %16 {offsets = [0, 96], sizes = [16, 32], strides = [1, 1]} : vector<16x128xbf16> to vector<16x32xbf16>
    %52 = vector.shape_cast %51 : vector<16x32xbf16> to vector<2x8x32xbf16>
    "tpu.trace_start"() <{level = 10 : i32, message = "bqd,bkd->bqk"}> : () -> ()
    %cst_25 = arith.constant dense<0.000000e+00> : vector<2x8x8xf32>
    %53 = tpu.matmul %50, %52, %cst_25 {dimension_numbers = #tpu.dot_dimension_numbers<[2], [2], [1], [1], [0, 0, 0, 1, 1, 1], [0], [0]>} : vector<2x8x32xbf16>, vector<2x8x32xbf16>, vector<2x8x8xf32> -> vector<2x8x8xf32>
    "tpu.trace_stop"() : () -> ()
    %c3 = arith.constant 3 : index
    %c0_26 = arith.constant 0 : index
    %c0_27 = arith.constant 0 : index
    %c0_28 = arith.constant 0 : index
    %54 = vector.load %arg15[%c3, %c0_26, %c0_27, %c0_28] : memref<4x2x8x8xf32, #tpu.memory_space<vmem>>, vector<1x2x8x8xf32>
    %55 = vector.shape_cast %54 : vector<1x2x8x8xf32> to vector<2x8x8xf32>
    %56 = vector.shape_cast %53 : vector<2x8x8xf32> to vector<1x2x8x8xf32>
    tpu.vector_store %arg15[%c3, %c0_26, %c0_27, %c0_28], %56 {strides = array<i32>} : memref<4x2x8x8xf32, #tpu.memory_space<vmem>>, vector<1x2x8x8xf32>,
    %c0_29 = arith.constant 0 : index
    %c0_30 = arith.constant 0 : index
    %c0_31 = arith.constant 0 : index
    %c0_32 = arith.constant 0 : index
    %57 = vector.load %arg15[%c0_29, %c0_30, %c0_31, %c0_32] : memref<4x2x8x8xf32, #tpu.memory_space<vmem>>, vector<4x2x8x8xf32>
    %58 = vector.shape_cast %24 : vector<2x8x8xf32> to vector<1x2x8x8xf32>
    %59 = vector.broadcast %58 : vector<1x2x8x8xf32> to vector<4x2x8x8xf32>
    %60 = arith.addf %57, %59 : vector<4x2x8x8xf32>
    %cst_33 = arith.constant dense<0xFF800000> : vector<4x2x8xf32>
    %61 = vector.multi_reduction <maximumf>, %60, %cst_33 [3] : vector<4x2x8x8xf32> to vector<4x2x8xf32>
    %62 = vector.shape_cast %61 : vector<4x2x8xf32> to vector<4x2x8x1xf32>
    %63 = vector.broadcast %62 : vector<4x2x8x1xf32> to vector<4x2x8x8xf32>
    %64 = arith.subf %60, %63 : vector<4x2x8x8xf32>
    %65 = math.exp %64 : vector<4x2x8x8xf32>
    %cst_34 = arith.constant dense<0.000000e+00> : vector<4x2x8xf32>
    %66 = vector.multi_reduction <add>, %65, %cst_34 [3] : vector<4x2x8x8xf32> to vector<4x2x8xf32>
    %67 = vector.shape_cast %66 : vector<4x2x8xf32> to vector<4x2x8x1xf32>
    %68 = tpu.reciprocal %67 {approx = true} : vector<4x2x8x1xf32> -> vector<4x2x8x1xf32>
    %69 = vector.broadcast %68 : vector<4x2x8x1xf32> to vector<4x2x8x8xf32>
    %70 = arith.mulf %65, %69 : vector<4x2x8x8xf32>
    %c0_35 = arith.constant 0 : index
    %c0_36 = arith.constant 0 : index
    %c0_37 = arith.constant 0 : index
    %c0_38 = arith.constant 0 : index
    %71 = vector.load %arg15[%c0_35, %c0_36, %c0_37, %c0_38] : memref<4x2x8x8xf32, #tpu.memory_space<vmem>>, vector<4x2x8x8xf32>
    tpu.vector_store %arg15[%c0_35, %c0_36, %c0_37, %c0_38], %70 {strides = array<i32>} : memref<4x2x8x8xf32, #tpu.memory_space<vmem>>, vector<4x2x8x8xf32>,
    %72 = arith.truncf %70 : vector<4x2x8x8xf32> to vector<4x2x8x8xbf16>
    %c0_39 = arith.constant 0 : index
    %c0_40 = arith.constant 0 : index
    %73 = vector.load %arg5[%c0_39, %c0_40] : memref<1x128xf32, #tpu.memory_space<vmem>>, vector<1x128xf32>
    %74 = vector.extract_strided_slice %18 {offsets = [0, 0], sizes = [16, 32], strides = [1, 1]} : vector<16x128xbf16> to vector<16x32xbf16>
    %75 = vector.shape_cast %74 : vector<16x32xbf16> to vector<2x8x32xbf16>
    %76 = vector.extract_strided_slice %72 {offsets = [0, 0, 0, 0], sizes = [1, 2, 8, 8], strides = [1, 1, 1, 1]} : vector<4x2x8x8xbf16> to vector<1x2x8x8xbf16>
    %77 = vector.shape_cast %76 : vector<1x2x8x8xbf16> to vector<2x8x8xbf16>
    "tpu.trace_start"() <{level = 10 : i32, message = "bqk,bkd->bqd"}> : () -> ()
    %cst_41 = arith.constant dense<0.000000e+00> : vector<2x8x32xf32>
    %78 = tpu.matmul %77, %75, %cst_41 {dimension_numbers = #tpu.dot_dimension_numbers<[2], [1], [1], [2], [0, 0, 0, 1, 1, 2], [0], [0]>} : vector<2x8x8xbf16>, vector<2x8x32xbf16>, vector<2x8x32xf32> -> vector<2x8x32xf32>
    "tpu.trace_stop"() : () -> ()
    %79 = vector.shape_cast %78 : vector<2x8x32xf32> to vector<16x32xf32>
    %80 = arith.truncf %79 : vector<16x32xf32> to vector<16x32xbf16>
    %c0_42 = arith.constant 0 : index
    %c0_43 = arith.constant 0 : index
    %81 = vector.load %arg4[%c0_42, %c0_43] : memref<128x128xbf16, #tpu.memory_space<vmem>>, vector<32x128xbf16>
    %cst_44 = arith.constant dense<0.000000e+00> : vector<16x128xf32>
    %82 = tpu.matmul %80, %81, %cst_44 {dimension_numbers = #tpu.dot_dimension_numbers<[1], [0], [0], [1], [0, 0, 1, 1], [], []>} : vector<16x32xbf16>, vector<32x128xbf16>, vector<16x128xf32> -> vector<16x128xf32>
    %83 = vector.broadcast %73 : vector<1x128xf32> to vector<16x128xf32>
    %84 = arith.addf %83, %82 : vector<16x128xf32>
    %85 = vector.extract_strided_slice %18 {offsets = [0, 32], sizes = [16, 32], strides = [1, 1]} : vector<16x128xbf16> to vector<16x32xbf16>
    %86 = vector.shape_cast %85 : vector<16x32xbf16> to vector<2x8x32xbf16>
    %87 = vector.extract_strided_slice %72 {offsets = [1, 0, 0, 0], sizes = [1, 2, 8, 8], strides = [1, 1, 1, 1]} : vector<4x2x8x8xbf16> to vector<1x2x8x8xbf16>
    %88 = vector.shape_cast %87 : vector<1x2x8x8xbf16> to vector<2x8x8xbf16>
    "tpu.trace_start"() <{level = 10 : i32, message = "bqk,bkd->bqd"}> : () -> ()
    %cst_45 = arith.constant dense<0.000000e+00> : vector<2x8x32xf32>
    %89 = tpu.matmul %88, %86, %cst_45 {dimension_numbers = #tpu.dot_dimension_numbers<[2], [1], [1], [2], [0, 0, 0, 1, 1, 2], [0], [0]>} : vector<2x8x8xbf16>, vector<2x8x32xbf16>, vector<2x8x32xf32> -> vector<2x8x32xf32>
    "tpu.trace_stop"() : () -> ()
    %90 = vector.shape_cast %89 : vector<2x8x32xf32> to vector<16x32xf32>
    %91 = arith.truncf %90 : vector<16x32xf32> to vector<16x32xbf16>
    %c32 = arith.constant 32 : index
    %c0_46 = arith.constant 0 : index
    %92 = vector.load %arg4[%c32, %c0_46] : memref<128x128xbf16, #tpu.memory_space<vmem>>, vector<32x128xbf16>
    %cst_47 = arith.constant dense<0.000000e+00> : vector<16x128xf32>
    %93 = tpu.matmul %91, %92, %cst_47 {dimension_numbers = #tpu.dot_dimension_numbers<[1], [0], [0], [1], [0, 0, 1, 1], [], []>} : vector<16x32xbf16>, vector<32x128xbf16>, vector<16x128xf32> -> vector<16x128xf32>
    %94 = arith.addf %84, %93 : vector<16x128xf32>
    %95 = vector.extract_strided_slice %18 {offsets = [0, 64], sizes = [16, 32], strides = [1, 1]} : vector<16x128xbf16> to vector<16x32xbf16>
    %96 = vector.shape_cast %95 : vector<16x32xbf16> to vector<2x8x32xbf16>
    %97 = vector.extract_strided_slice %72 {offsets = [2, 0, 0, 0], sizes = [1, 2, 8, 8], strides = [1, 1, 1, 1]} : vector<4x2x8x8xbf16> to vector<1x2x8x8xbf16>
    %98 = vector.shape_cast %97 : vector<1x2x8x8xbf16> to vector<2x8x8xbf16>
    "tpu.trace_start"() <{level = 10 : i32, message = "bqk,bkd->bqd"}> : () -> ()
    %cst_48 = arith.constant dense<0.000000e+00> : vector<2x8x32xf32>
    %99 = tpu.matmul %98, %96, %cst_48 {dimension_numbers = #tpu.dot_dimension_numbers<[2], [1], [1], [2], [0, 0, 0, 1, 1, 2], [0], [0]>} : vector<2x8x8xbf16>, vector<2x8x32xbf16>, vector<2x8x32xf32> -> vector<2x8x32xf32>
    "tpu.trace_stop"() : () -> ()
    %100 = vector.shape_cast %99 : vector<2x8x32xf32> to vector<16x32xf32>
    %101 = arith.truncf %100 : vector<16x32xf32> to vector<16x32xbf16>
    %c64 = arith.constant 64 : index
    %c0_49 = arith.constant 0 : index
    %102 = vector.load %arg4[%c64, %c0_49] : memref<128x128xbf16, #tpu.memory_space<vmem>>, vector<32x128xbf16>
    %cst_50 = arith.constant dense<0.000000e+00> : vector<16x128xf32>
    %103 = tpu.matmul %101, %102, %cst_50 {dimension_numbers = #tpu.dot_dimension_numbers<[1], [0], [0], [1], [0, 0, 1, 1], [], []>} : vector<16x32xbf16>, vector<32x128xbf16>, vector<16x128xf32> -> vector<16x128xf32>
    %104 = arith.addf %94, %103 : vector<16x128xf32>
    %105 = vector.extract_strided_slice %18 {offsets = [0, 96], sizes = [16, 32], strides = [1, 1]} : vector<16x128xbf16> to vector<16x32xbf16>
    %106 = vector.shape_cast %105 : vector<16x32xbf16> to vector<2x8x32xbf16>
    %107 = vector.extract_strided_slice %72 {offsets = [3, 0, 0, 0], sizes = [1, 2, 8, 8], strides = [1, 1, 1, 1]} : vector<4x2x8x8xbf16> to vector<1x2x8x8xbf16>
    %108 = vector.shape_cast %107 : vector<1x2x8x8xbf16> to vector<2x8x8xbf16>
    "tpu.trace_start"() <{level = 10 : i32, message = "bqk,bkd->bqd"}> : () -> ()
    %cst_51 = arith.constant dense<0.000000e+00> : vector<2x8x32xf32>
    %109 = tpu.matmul %108, %106, %cst_51 {dimension_numbers = #tpu.dot_dimension_numbers<[2], [1], [1], [2], [0, 0, 0, 1, 1, 2], [0], [0]>} : vector<2x8x8xbf16>, vector<2x8x32xbf16>, vector<2x8x32xf32> -> vector<2x8x32xf32>
    "tpu.trace_stop"() : () -> ()
    %110 = vector.shape_cast %109 : vector<2x8x32xf32> to vector<16x32xf32>
    %111 = arith.truncf %110 : vector<16x32xf32> to vector<16x32xbf16>
    %c96 = arith.constant 96 : index
    %c0_52 = arith.constant 0 : index
    %112 = vector.load %arg4[%c96, %c0_52] : memref<128x128xbf16, #tpu.memory_space<vmem>>, vector<32x128xbf16>
    %cst_53 = arith.constant dense<0.000000e+00> : vector<16x128xf32>
    %113 = tpu.matmul %111, %112, %cst_53 {dimension_numbers = #tpu.dot_dimension_numbers<[1], [0], [0], [1], [0, 0, 1, 1], [], []>} : vector<16x32xbf16>, vector<32x128xbf16>, vector<16x128xf32> -> vector<16x128xf32>
    %114 = arith.addf %104, %113 : vector<16x128xf32>
    %115 = arith.addf %4, %114 : vector<16x128xf32>
    %c0_54 = arith.constant 0 : index
    %c0_55 = arith.constant 0 : index
    %116 = vector.load %arg6[%c0_54, %c0_55] : memref<1x128xf32, #tpu.memory_space<vmem>>, vector<1x128xf32>
    %c0_56 = arith.constant 0 : index
    %c0_57 = arith.constant 0 : index
    %117 = vector.load %arg7[%c0_56, %c0_57] : memref<1x128xf32, #tpu.memory_space<vmem>>, vector<1x128xf32>
    %cst_58 = arith.constant dense<0.000000e+00> : vector<16xf32>
    %118 = vector.multi_reduction <add>, %115, %cst_58 [1] : vector<16x128xf32> to vector<16xf32>
    %119 = vector.shape_cast %118 : vector<16xf32> to vector<16x1xf32>
    %cst_59 = arith.constant 1.280000e+02 : f32
    %120 = vector.broadcast %cst_59 : f32 to vector<16x1xf32>
    %121 = arith.divf %119, %120 : vector<16x1xf32>
    %122 = vector.broadcast %121 : vector<16x1xf32> to vector<16x128xf32>
    %123 = arith.subf %115, %122 : vector<16x128xf32>
    %124 = arith.mulf %123, %123 : vector<16x128xf32>
    %cst_60 = arith.constant dense<0.000000e+00> : vector<16xf32>
    %125 = vector.multi_reduction <add>, %124, %cst_60 [1] : vector<16x128xf32> to vector<16xf32>
    %126 = vector.shape_cast %125 : vector<16xf32> to vector<16x1xf32>
    %cst_61 = arith.constant 1.280000e+02 : f32
    %127 = vector.broadcast %cst_61 : f32 to vector<16x1xf32>
    %128 = arith.divf %126, %127 : vector<16x1xf32>
    %129 = vector.broadcast %121 : vector<16x1xf32> to vector<16x128xf32>
    %130 = arith.subf %115, %129 : vector<16x128xf32>
    %cst_62 = arith.constant 9.99999974E-6 : f32
    %131 = vector.broadcast %cst_62 : f32 to vector<16x1xf32>
    %132 = arith.addf %128, %131 : vector<16x1xf32>
    %133 = math.rsqrt %132 : vector<16x1xf32>
    %134 = vector.broadcast %133 : vector<16x1xf32> to vector<16x128xf32>
    %135 = arith.mulf %130, %134 : vector<16x128xf32>
    %136 = vector.broadcast %116 : vector<1x128xf32> to vector<16x128xf32>
    %137 = arith.mulf %135, %136 : vector<16x128xf32>
    %138 = vector.broadcast %117 : vector<1x128xf32> to vector<16x128xf32>
    %139 = arith.addf %137, %138 : vector<16x128xf32>
    %c0_i32_63 = arith.constant 0 : i32
    %140 = tpu.memref_slice %arg18[%c0_i32_63] : memref<2x!tpu.dma_semaphore, #tpu.memory_space<semaphore_mem>> -> memref<1x!tpu.dma_semaphore, #tpu.memory_space<semaphore_mem>>
    %141 = tpu.memref_squeeze %140 : memref<1x!tpu.dma_semaphore, #tpu.memory_space<semaphore_mem>> -> memref<!tpu.dma_semaphore, #tpu.memory_space<semaphore_mem>>
    tpu.wait_dma2 semaphore(%141 : memref<!tpu.dma_semaphore, #tpu.memory_space<semaphore_mem>>) src(%arg12 : memref<128x1024xbf16, #tpu.memory_space<any>>) dst(%arg16 : memref<128x1024xbf16, #tpu.memory_space<vmem>>)
    %142 = arith.truncf %139 : vector<16x128xf32> to vector<16x128xbf16>
    %c0_64 = arith.constant 0 : index
    %c0_65 = arith.constant 0 : index
    %143 = vector.load %arg16[%c0_64, %c0_65] : memref<128x1024xbf16, #tpu.memory_space<vmem>>, vector<128x1024xbf16>
    %cst_66 = arith.constant dense<0.000000e+00> : vector<16x1024xf32>
    %144 = tpu.matmul %142, %143, %cst_66 {dimension_numbers = #tpu.dot_dimension_numbers<[1], [0], [0], [1], [0, 0, 1, 1], [], []>} : vector<16x128xbf16>, vector<128x1024xbf16>, vector<16x1024xf32> -> vector<16x1024xf32>
    %c0_67 = arith.constant 0 : index
    %c0_68 = arith.constant 0 : index
    %145 = vector.load %arg8[%c0_67, %c0_68] : memref<1x1024xf32, #tpu.memory_space<vmem>>, vector<1x1024xf32>
    %146 = vector.broadcast %145 : vector<1x1024xf32> to vector<16x1024xf32>
    %147 = arith.addf %144, %146 : vector<16x1024xf32>
    %cst_69 = arith.constant 0.000000e+00 : f32
    %148 = vector.broadcast %cst_69 : f32 to vector<16x1024xf32>
    %149 = arith.maximumf %147, %148 : vector<16x1024xf32>
    %c1_i32_70 = arith.constant 1 : i32
    %150 = tpu.memref_slice %arg18[%c1_i32_70] : memref<2x!tpu.dma_semaphore, #tpu.memory_space<semaphore_mem>> -> memref<1x!tpu.dma_semaphore, #tpu.memory_space<semaphore_mem>>
    %151 = tpu.memref_squeeze %150 : memref<1x!tpu.dma_semaphore, #tpu.memory_space<semaphore_mem>> -> memref<!tpu.dma_semaphore, #tpu.memory_space<semaphore_mem>>
    tpu.wait_dma2 semaphore(%151 : memref<!tpu.dma_semaphore, #tpu.memory_space<semaphore_mem>>) src(%arg13 : memref<1024x128xbf16, #tpu.memory_space<any>>) dst(%arg17 : memref<1024x128xbf16, #tpu.memory_space<vmem>>)
    %152 = arith.truncf %149 : vector<16x1024xf32> to vector<16x1024xbf16>
    %c0_71 = arith.constant 0 : index
    %c0_72 = arith.constant 0 : index
    %153 = vector.load %arg17[%c0_71, %c0_72] : memref<1024x128xbf16, #tpu.memory_space<vmem>>, vector<1024x128xbf16>
    %cst_73 = arith.constant dense<0.000000e+00> : vector<16x128xf32>
    %154 = tpu.matmul %152, %153, %cst_73 {dimension_numbers = #tpu.dot_dimension_numbers<[1], [0], [0], [1], [0, 0, 1, 1], [], []>} : vector<16x1024xbf16>, vector<1024x128xbf16>, vector<16x128xf32> -> vector<16x128xf32>
    %c0_74 = arith.constant 0 : index
    %c0_75 = arith.constant 0 : index
    %155 = vector.load %arg9[%c0_74, %c0_75] : memref<1x128xf32, #tpu.memory_space<vmem>>, vector<1x128xf32>
    %156 = vector.broadcast %155 : vector<1x128xf32> to vector<16x128xf32>
    %157 = arith.addf %154, %156 : vector<16x128xf32>
    %158 = arith.addf %139, %157 : vector<16x128xf32>
    %c0_76 = arith.constant 0 : index
    %c0_77 = arith.constant 0 : index
    %159 = vector.load %arg10[%c0_76, %c0_77] : memref<1x128xf32, #tpu.memory_space<vmem>>, vector<1x128xf32>
    %c0_78 = arith.constant 0 : index
    %c0_79 = arith.constant 0 : index
    %160 = vector.load %arg11[%c0_78, %c0_79] : memref<1x128xf32, #tpu.memory_space<vmem>>, vector<1x128xf32>
    %cst_80 = arith.constant dense<0.000000e+00> : vector<16xf32>
    %161 = vector.multi_reduction <add>, %158, %cst_80 [1] : vector<16x128xf32> to vector<16xf32>
    %162 = vector.shape_cast %161 : vector<16xf32> to vector<16x1xf32>
    %cst_81 = arith.constant 1.280000e+02 : f32
    %163 = vector.broadcast %cst_81 : f32 to vector<16x1xf32>
    %164 = arith.divf %162, %163 : vector<16x1xf32>
    %165 = vector.broadcast %164 : vector<16x1xf32> to vector<16x128xf32>
    %166 = arith.subf %158, %165 : vector<16x128xf32>
    %167 = arith.mulf %166, %166 : vector<16x128xf32>
    %cst_82 = arith.constant dense<0.000000e+00> : vector<16xf32>
    %168 = vector.multi_reduction <add>, %167, %cst_82 [1] : vector<16x128xf32> to vector<16xf32>
    %169 = vector.shape_cast %168 : vector<16xf32> to vector<16x1xf32>
    %cst_83 = arith.constant 1.280000e+02 : f32
    %170 = vector.broadcast %cst_83 : f32 to vector<16x1xf32>
    %171 = arith.divf %169, %170 : vector<16x1xf32>
    %172 = vector.broadcast %164 : vector<16x1xf32> to vector<16x128xf32>
    %173 = arith.subf %158, %172 : vector<16x128xf32>
    %cst_84 = arith.constant 9.99999974E-6 : f32
    %174 = vector.broadcast %cst_84 : f32 to vector<16x1xf32>
    %175 = arith.addf %171, %174 : vector<16x1xf32>
    %176 = math.rsqrt %175 : vector<16x1xf32>
    %177 = vector.broadcast %176 : vector<16x1xf32> to vector<16x128xf32>
    %178 = arith.mulf %173, %177 : vector<16x128xf32>
    %179 = vector.broadcast %159 : vector<1x128xf32> to vector<16x128xf32>
    %180 = arith.mulf %178, %179 : vector<16x128xf32>
    %181 = vector.broadcast %160 : vector<1x128xf32> to vector<16x128xf32>
    %182 = arith.addf %180, %181 : vector<16x128xf32>
    %c0_85 = arith.constant 0 : index
    %c0_86 = arith.constant 0 : index
    %183 = vector.load %arg14[%c0_85, %c0_86] : memref<16x128xf32, #tpu.memory_space<vmem>>, vector<16x128xf32>
    tpu.vector_store %arg14[%c0_85, %c0_86], %182 {strides = array<i32>} : memref<16x128xf32, #tpu.memory_space<vmem>>, vector<16x128xf32>,
    return
  }
}

</mosaic_0001>

<llo_original>
// kernel: encoder_layer.1
$region0: #{encoder_layer.1}
  #allocation0 [shape = 'u32[]', space=smem, size = 0x4, offset = 0x4, fixed_abs, tag = 'smem constant byte address 0x4 - core index']
  #allocation1 [shape = 'u32[72,128]{1,0:T(1,128)}', space=vmem, size = 0x9000, scoped, tag = 'internal scratch']
  #allocation2 [shape = 'bf16[128,1024]{1,0:T(8,128)(2,1)}', space=vmem, size = 0x40000, scoped, tag = 'scratch operand']
  #allocation3 [shape = 'bf16[1024,128]{1,0:T(8,128)(2,1)}', space=vmem, size = 0x40000, scoped, tag = 'scratch operand']
  #allocation4 [shape = 's32[2]{0}', space=sflag, size = 0x8, scoped, tag = 'scratch operand']
  #allocation17 [shape = 's32[]', space=sflag, size = 0x4, offset = 0, fixed_abs, tag = 'sflag constant byte address 0x0 - dummy sync flag']
  #allocation18 [shape = 's32[]', space=sflag, size = 0x4, offset = 0, fixed_abs, tag = 'sflag constant byte address 0x0 - dummy sync flag']
  #allocation19 [shape = 'u32[]', space=smem, size = 0x4, offset = 0x44, fixed_abs, tag = 'smem constant byte address 0x44 - assertion arg 0']
  #allocation20 [shape = 'u32[]', space=smem, size = 0x4, offset = 0x48, fixed_abs, tag = 'smem constant byte address 0x48 - assertion arg 1']
  #allocation21 [shape = 's32[]', space=sflag, size = 0x4, offset = 0, fixed_abs, tag = 'sflag constant byte address 0x0 - dummy sync flag']
  #allocation22 [shape = 's32[]', space=sflag, size = 0x4, offset = 0, fixed_abs, tag = 'sflag constant byte address 0x0 - dummy sync flag']
  %s0 = inlined_call_operand.hbm [shape: f32[16,128], index: 0, kind: input, shape index: {}]
  %s1 = inlined_call_operand.hbm [shape: s32[2,8,8], index: 1, kind: input, shape index: {}]
  %s2 = inlined_call_operand.hbm [shape: bf16[128,384], index: 2, kind: input, shape index: {}]
  %s3 = inlined_call_operand.vmem [shape: f32[1,384], index: 3, kind: input, shape index: {}]
  %s4 = inlined_call_operand.hbm [shape: bf16[128,128], index: 4, kind: input, shape index: {}]
  %s5 = inlined_call_operand.vmem [shape: f32[1,128], index: 5, kind: input, shape index: {}]
  %s6 = inlined_call_operand.vmem [shape: f32[1,128], index: 6, kind: input, shape index: {}]
  %s7 = inlined_call_operand.vmem [shape: f32[1,128], index: 7, kind: input, shape index: {}]
  %s8 = inlined_call_operand.hbm [shape: f32[1,1024], index: 8, kind: input, shape index: {}]
  %s9 = inlined_call_operand.hbm [shape: f32[1,128], index: 9, kind: input, shape index: {}]
  %s10 = inlined_call_operand.vmem [shape: f32[1,128], index: 10, kind: input, shape index: {}]
  %s11 = inlined_call_operand.vmem [shape: f32[1,128], index: 11, kind: input, shape index: {}]
  %s12 = inlined_call_operand.hbm [shape: bf16[128,1024], index: 12, kind: input, shape index: {}]
  %s13 = inlined_call_operand.hbm [shape: bf16[1024,128], index: 13, kind: input, shape index: {}]
  %s14 = inlined_call_operand.hbm [shape: f32[16,128], index: 14, kind: output, shape index: {0}]
  %s15 = inlined_call_operand.vmem [shape: f32[4,2,8,8], index: 15, kind: output, shape index: {1}]
  %16 = xla_tuple %s14, %s15
  %s17 = sld [smem:[#allocation0]]
  $region98: #{encoder_layer.1} parent=0
    _
  %s19 = ssub.s32 1, %s17
  %s20 = scalar_select 0, %s19, %s17
  $region1: #{encoder_layer.1} parent=0
    #allocation5 [shape = 'u8[8192]{0}', space=vmem, size = 0x2000, scoped, tag = 'input window, operand 0, single buffered']
    #allocation6 [shape = 's32[1]{0}', space=sflag, size = 0x4, scoped, tag = 'scoped memory for encoder_layer.1']
    #allocation7 [shape = 's32[1]{0}', space=sflag, size = 0x4, scoped, tag = 'scoped memory for encoder_layer.1']
    #allocation8 [shape = 'u8[8192]{0}', space=vmem, size = 0x2000, scoped, tag = 'input window, operand 1, single buffered']
    #allocation9 [shape = 's32[1]{0}', space=sflag, size = 0x4, scoped, tag = 'scoped memory for encoder_layer.1']
    #allocation10 [shape = 'u8[98304]{0}', space=vmem, size = 0x18000, scoped, tag = 'input window, operand 2, single buffered']
    #allocation11 [shape = 'u8[32768]{0}', space=vmem, size = 0x8000, scoped, tag = 'input window, operand 4, single buffered']
    #allocation12 [shape = 's32[1]{0}', space=sflag, size = 0x4, scoped, tag = 'scoped memory for encoder_layer.1']
    #allocation13 [shape = 'u8[4096]{0}', space=vmem, size = 0x1000, scoped, tag = 'input window, operand 8, single buffered']
    #allocation14 [shape = 'u8[512]{0}', space=vmem, size = 0x400, scoped, tag = 'input window, operand 9, single buffered']
    #allocation15 [shape = 's32[1]{0}', space=sflag, size = 0x4, scoped, tag = 'scoped memory for encoder_layer.1']
    #allocation16 [shape = 'u8[8192]{0}', space=vmem, size = 0x2000, scoped, tag = 'output window, operand 0, single buffered']
    %21 = vsyncpa [#allocation6], 0
    %22 = vsyncpa [#allocation9], 0
    %23 = vsyncpa [#allocation12], 0
    %24 = vsyncpa [#allocation15], 0
    %25 = vsyncpa [#allocation7], 0
    // Predicated region
    $region2: #{encoder_layer.1} parent=1 // pred_check
      _
    $region3: #{encoder_layer.1} parent=1 // pred_check_branch
      %27 = sbr.rel (0) target = $region5
    $region4: #{encoder_layer.1} parent=1 // pred_region
      %29 = vsyncadd [#allocation6], 0
      %s30 = sshll.u32 %s0, 4
      %s31 = int_to_ptr.hbm [resolvable:$true] %s30
      %s32 = sshll.u32 [#allocation5], 4
      %s33 = int_to_ptr.vmem [resolvable:$true] %s32
      %38 = dma.hbm_to_vmem [thread:$0]  %s31, 256, %s33, [#allocation6], 128, 128, 8
    $region5: #{encoder_layer.1} parent=1 // pred_fallthru
      _
    // Predicated region
    $region6: #{encoder_layer.1} parent=1 // pred_check
      _
    $region7: #{encoder_layer.1} parent=1 // pred_check_branch
      %40 = sbr.rel (0) target = $region9
    $region8: #{encoder_layer.1} parent=1 // pred_region
      %42 = vsyncadd [#allocation9], 0
      %s43 = sshll.u32 %s1, 4
      %s44 = int_to_ptr.hbm [resolvable:$true] %s43
      %s45 = sshll.u32 [#allocation8], 4
      %s46 = int_to_ptr.vmem [resolvable:$true] %s45
      %51 = dma.hbm_to_vmem [thread:$0]  %s44, 256, %s46, [#allocation9], 128, 128, 8
    $region9: #{encoder_layer.1} parent=1 // pred_fallthru
      _
    // Predicated region
    $region10: #{encoder_layer.1} parent=1 // pred_check
      _
    $region11: #{encoder_layer.1} parent=1 // pred_check_branch
      %53 = sbr.rel (0) target = $region13
    $region12: #{encoder_layer.1} parent=1 // pred_region
      %55 = vsyncadd [#allocation9], 0
      %s56 = sshll.u32 %s2, 4
      %s57 = int_to_ptr.hbm [resolvable:$true] %s56
      %s58 = sshll.u32 [#allocation10], 4
      %s59 = int_to_ptr.vmem [resolvable:$true] %s58
      %64 = dma.hbm_to_vmem [thread:$0]  %s57, 3072, %s59, [#allocation9], 192, 192, 12
    $region13: #{encoder_layer.1} parent=1 // pred_fallthru
      _
    // Predicated region
    $region14: #{encoder_layer.1} parent=1 // pred_check
      _
    $region15: #{encoder_layer.1} parent=1 // pred_check_branch
      %66 = sbr.rel (0) target = $region17
    $region16: #{encoder_layer.1} parent=1 // pred_region
      _
    $region17: #{encoder_layer.1} parent=1 // pred_fallthru
      _
    // Predicated region
    $region18: #{encoder_layer.1} parent=1 // pred_check
      _
    $region19: #{encoder_layer.1} parent=1 // pred_check_branch
      %68 = sbr.rel (0) target = $region21
    $region20: #{encoder_layer.1} parent=1 // pred_region
      %70 = vsyncadd [#allocation12], 0
      %s71 = sshll.u32 %s4, 4
      %s72 = int_to_ptr.hbm [resolvable:$true] %s71
      %s73 = sshll.u32 [#allocation11], 4
      %s74 = int_to_ptr.vmem [resolvable:$true] %s73
      %79 = dma.hbm_to_vmem [thread:$0]  %s72, 1024, %s74, [#allocation12], 64, 64, 4
    $region21: #{encoder_layer.1} parent=1 // pred_fallthru
      _
    // Predicated region
    $region22: #{encoder_layer.1} parent=1 // pred_check
      _
    $region23: #{encoder_layer.1} parent=1 // pred_check_branch
      %81 = sbr.rel (0) target = $region25
    $region24: #{encoder_layer.1} parent=1 // pred_region
      _
    $region25: #{encoder_layer.1} parent=1 // pred_fallthru
      _
    // Predicated region
    $region26: #{encoder_layer.1} parent=1 // pred_check
      _
    $region27: #{encoder_layer.1} parent=1 // pred_check_branch
      %83 = sbr.rel (0) target = $region29
    $region28: #{encoder_layer.1} parent=1 // pred_region
      _
    $region29: #{encoder_layer.1} parent=1 // pred_fallthru
      _
    // Predicated region
    $region30: #{encoder_layer.1} parent=1 // pred_check
      _
    $region31: #{encoder_layer.1} parent=1 // pred_check_branch
      %85 = sbr.rel (0) target = $region33
    $region32: #{encoder_layer.1} parent=1 // pred_region
      _
    $region33: #{encoder_layer.1} parent=1 // pred_fallthru
      _
    // Predicated region
    $region34: #{encoder_layer.1} parent=1 // pred_check
      _
    $region35: #{encoder_layer.1} parent=1 // pred_check_branch
      %87 = sbr.rel (0) target = $region37
    $region36: #{encoder_layer.1} parent=1 // pred_region
      %89 = vsyncadd [#allocation12], 0
      %s91 = sshll.u32 %s8, 4
      %s92 = int_to_ptr.hbm [resolvable:$true] %s91
      %s93 = sshll.u32 [#allocation13], 4
      %s94 = int_to_ptr.vmem [resolvable:$true] %s93
      %96 = dma.hbm_to_vmem [thread:$0]  %s92, 128, %s94, [#allocation12]
    $region37: #{encoder_layer.1} parent=1 // pred_fallthru
      _
    // Predicated region
    $region38: #{encoder_layer.1} parent=1 // pred_check
      _
    $region39: #{encoder_layer.1} parent=1 // pred_check_branch
      %98 = sbr.rel (0) target = $region41
    $region40: #{encoder_layer.1} parent=1 // pred_region
      %100 = vsyncadd [#allocation15], 0
      %s102 = sshll.u32 %s9, 4
      %s103 = int_to_ptr.hbm [resolvable:$true] %s102
      %s104 = sshll.u32 [#allocation14], 4
      %s105 = int_to_ptr.vmem [resolvable:$true] %s104
      %107 = dma.hbm_to_vmem [thread:$0]  %s103, 16, %s105, [#allocation15]
    $region41: #{encoder_layer.1} parent=1 // pred_fallthru
      _
    // Predicated region
    $region42: #{encoder_layer.1} parent=1 // pred_check
      _
    $region43: #{encoder_layer.1} parent=1 // pred_check_branch
      %109 = sbr.rel (0) target = $region45
    $region44: #{encoder_layer.1} parent=1 // pred_region
      _
    $region45: #{encoder_layer.1} parent=1 // pred_fallthru
      _
    // Predicated region
    $region46: #{encoder_layer.1} parent=1 // pred_check
      _
    $region47: #{encoder_layer.1} parent=1 // pred_check_branch
      %111 = sbr.rel (0) target = $region49
    $region48: #{encoder_layer.1} parent=1 // pred_region
      _
    $region49: #{encoder_layer.1} parent=1 // pred_fallthru
      _
    // Predicated region
    $region50: #{encoder_layer.1} parent=1 // pred_check
      _
    $region51: #{encoder_layer.1} parent=1 // pred_check_branch
      %113 = sbr.rel (0) target = $region53
    $region52: #{encoder_layer.1} parent=1 // pred_region
      %115 = dma.done [#allocation6], 256
    $region53: #{encoder_layer.1} parent=1 // pred_fallthru
      _
    // Predicated region
    $region54: #{encoder_layer.1} parent=1 // pred_check
      _
    $region55: #{encoder_layer.1} parent=1 // pred_check_branch
      %117 = sbr.rel (0) target = $region57
    $region56: #{encoder_layer.1} parent=1 // pred_region
      %119 = dma.done [#allocation9], 256
    $region57: #{encoder_layer.1} parent=1 // pred_fallthru
      _
    // Predicated region
    $region58: #{encoder_layer.1} parent=1 // pred_check
      _
    $region59: #{encoder_layer.1} parent=1 // pred_check_branch
      %121 = sbr.rel (0) target = $region61
    $region60: #{encoder_layer.1} parent=1 // pred_region
      %123 = dma.done [#allocation9], 3072
    $region61: #{encoder_layer.1} parent=1 // pred_fallthru
      _
    // Predicated region
    $region62: #{encoder_layer.1} parent=1 // pred_check
      _
    $region63: #{encoder_layer.1} parent=1 // pred_check_branch
      %125 = sbr.rel (0) target = $region65
    $region64: #{encoder_layer.1} parent=1 // pred_region
      %127 = dma.done [#allocation12], 1024
    $region65: #{encoder_layer.1} parent=1 // pred_fallthru
      _
    // Predicated region
    $region66: #{encoder_layer.1} parent=1 // pred_check
      _
    $region67: #{encoder_layer.1} parent=1 // pred_check_branch
      %129 = sbr.rel (0) target = $region69
    $region68: #{encoder_layer.1} parent=1 // pred_region
      %131 = dma.done [#allocation12], 128
    $region69: #{encoder_layer.1} parent=1 // pred_fallthru
      _
    // Predicated region
    $region70: #{encoder_layer.1} parent=1 // pred_check
      _
    $region71: #{encoder_layer.1} parent=1 // pred_check_branch
      %133 = sbr.rel (0) target = $region73
    $region72: #{encoder_layer.1} parent=1 // pred_region
      %135 = dma.done [#allocation15], 16
    $region73: #{encoder_layer.1} parent=1 // pred_fallthru
      _
    // Predicated region
    $region74: #{encoder_layer.1} parent=1 // pred_check
      _
    $region75: #{encoder_layer.1} parent=1 // pred_check_branch
      %138 = sbr.rel target = $region77
    $region76: #{encoder_layer.1} parent=1 // pred_region
      %139 = sst [smem:[#allocation19]] [#allocation18]
      %140 = sst [smem:[#allocation20]] [#allocation17]
    $region77: #{encoder_layer.1} parent=1 // pred_fallthru
      _
    %142 = shalt.err (0)
    %s144 = sshll.u32 %s12, 4
    %s145 = int_to_ptr.hbm [resolvable:$true] %s144
    %s146 = sshll.u32 [#allocation2], 4
    %s147 = int_to_ptr.vmem [resolvable:$true] %s146
    %149 = dma.hbm_to_vmem [thread:$0]  %s145, 8192, %s147, [#allocation4]
    %s150 = scalar_lea.sflag [#allocation4], 1
    // Predicated region
    $region78: #{encoder_layer.1} parent=1 // pred_check
      _
    $region79: #{encoder_layer.1} parent=1 // pred_check_branch
      %152 = sbr.rel target = $region81
    $region80: #{encoder_layer.1} parent=1 // pred_region
      %153 = sst [smem:[#allocation19]] [#allocation22]
      %154 = sst [smem:[#allocation20]] [#allocation21]
    $region81: #{encoder_layer.1} parent=1 // pred_fallthru
      _
    %156 = shalt.err (0)
    %s158 = sshll.u32 %s13, 4
    %s159 = int_to_ptr.hbm [resolvable:$true] %s158
    %s160 = sshll.u32 [#allocation3], 4
    %s161 = int_to_ptr.vmem [resolvable:$true] %s160
    %163 = dma.hbm_to_vmem [thread:$0]  %s159, 8192, %s161, %s150
    %v164 = vld [vmem:[#allocation5] sm:$0xff]
    %v165 = vld [vmem:[#allocation5 + $0x8] sm:$0xff]
    %v166 = vpack.c.bf16 %v165, %v164
    %v167 = vld [vmem:[#allocation10] sm:$0xff]
    %v168 = vld [vmem:[#allocation10 + $0x8] sm:$0xf]
    %v169 = vld [vmem:[#allocation10 + $0xc] sm:$0xff]
    %v170 = vld [vmem:[#allocation10 + $0x14] sm:$0xf]
    %v171 = vld [vmem:[#allocation10 + $0x18] sm:$0xff]
    %v172 = vld [vmem:[#allocation10 + $0x20] sm:$0xf]
    %v173 = vld [vmem:[#allocation10 + $0x24] sm:$0xff]
    %v174 = vld [vmem:[#allocation10 + $0x2c] sm:$0xf]
    %v175 = vld [vmem:[#allocation10 + $0x30] sm:$0xff]
    %v176 = vld [vmem:[#allocation10 + $0x38] sm:$0xf]
    %v177 = vld [vmem:[#allocation10 + $0x3c] sm:$0xff]
    %v178 = vld [vmem:[#allocation10 + $0x44] sm:$0xf]
    %v179 = vld [vmem:[#allocation10 + $0x48] sm:$0xff]
    %v180 = vld [vmem:[#allocation10 + $0x50] sm:$0xf]
    %v181 = vld [vmem:[#allocation10 + $0x54] sm:$0xff]
    %v182 = vld [vmem:[#allocation10 + $0x5c] sm:$0xf]
    %v183 = vld [vmem:[#allocation10 + $0x60] sm:$0xff]
    %v184 = vld [vmem:[#allocation10 + $0x68] sm:$0xf]
    %v185 = vld [vmem:[#allocation10 + $0x6c] sm:$0xff]
    %v186 = vld [vmem:[#allocation10 + $0x74] sm:$0xf]
    %v187 = vld [vmem:[#allocation10 + $0x78] sm:$0xff]
    %v188 = vld [vmem:[#allocation10 + $0x80] sm:$0xf]
    %v189 = vld [vmem:[#allocation10 + $0x84] sm:$0xff]
    %v190 = vld [vmem:[#allocation10 + $0x8c] sm:$0xf]
    %v191 = vld [vmem:[#allocation10 + $0x90] sm:$0xff]
    %v192 = vld [vmem:[#allocation10 + $0x98] sm:$0xf]
    %v193 = vld [vmem:[#allocation10 + $0x9c] sm:$0xff]
    %v194 = vld [vmem:[#allocation10 + $0xa4] sm:$0xf]
    %v195 = vld [vmem:[#allocation10 + $0xa8] sm:$0xff]
    %v196 = vld [vmem:[#allocation10 + $0xb0] sm:$0xf]
    %v197 = vld [vmem:[#allocation10 + $0xb4] sm:$0xff]
    %v198 = vld [vmem:[#allocation10 + $0xbc] sm:$0xf]
    %v199 = vld [vmem:[%s3] sm:$0x7]
    %v201 = vperm.slane %v199, 0
    %v202 = vperm.slane %v199, 1
    %v203 = vperm.slane %v199, 2
    %v239 = vunpack.c.l.b16 %v167
    %v240 = vunpack.c.h.b16 %v167
    %v241 = vunpack.c.l.b16 %v168
    %v242 = vunpack.c.l.b16 %v169
    %v243 = vunpack.c.h.b16 %v169
    %v244 = vunpack.c.l.b16 %v170
    %v245 = vunpack.c.l.b16 %v171
    %v246 = vunpack.c.h.b16 %v171
    %v247 = vunpack.c.l.b16 %v172
    %v248 = vunpack.c.l.b16 %v173
    %v249 = vunpack.c.h.b16 %v173
    %v250 = vunpack.c.l.b16 %v174
    %v251 = vunpack.c.l.b16 %v175
    %v252 = vunpack.c.h.b16 %v175
    %v253 = vunpack.c.l.b16 %v176
    %v254 = vunpack.c.l.b16 %v177
    %v255 = vunpack.c.h.b16 %v177
    %v256 = vunpack.c.l.b16 %v178
    %v257 = vunpack.c.l.b16 %v179
    %v258 = vunpack.c.h.b16 %v179
    %v259 = vunpack.c.l.b16 %v180
    %v260 = vunpack.c.l.b16 %v181
    %v261 = vunpack.c.h.b16 %v181
    %v262 = vunpack.c.l.b16 %v182
    %v263 = vunpack.c.l.b16 %v183
    %v264 = vunpack.c.h.b16 %v183
    %v265 = vunpack.c.l.b16 %v184
    %v266 = vunpack.c.l.b16 %v185
    %v267 = vunpack.c.h.b16 %v185
    %v268 = vunpack.c.l.b16 %v186
    %v269 = vunpack.c.l.b16 %v187
    %v270 = vunpack.c.h.b16 %v187
    %v271 = vunpack.c.l.b16 %v188
    %v272 = vunpack.c.l.b16 %v189
    %v273 = vunpack.c.h.b16 %v189
    %v274 = vunpack.c.l.b16 %v190
    %v275 = vunpack.c.l.b16 %v191
    %v276 = vunpack.c.h.b16 %v191
    %v277 = vunpack.c.l.b16 %v192
    %v278 = vunpack.c.l.b16 %v193
    %v279 = vunpack.c.h.b16 %v193
    %v280 = vunpack.c.l.b16 %v194
    %v281 = vunpack.c.l.b16 %v195
    %v282 = vunpack.c.h.b16 %v195
    %v283 = vunpack.c.l.b16 %v196
    %v284 = vunpack.c.l.b16 %v197
    %v285 = vunpack.c.h.b16 %v197
    %v286 = vunpack.c.l.b16 %v198
    %v287 = vpack.c.b16 %v242, %v239
    %v288 = vpack.c.b16 %v243, %v240
    %v289 = vpack.c.b16 %v244, %v241
    %v290 = vpack.c.b16 %v248, %v245
    %v291 = vpack.c.b16 %v249, %v246
    %v292 = vpack.c.b16 %v250, %v247
    %v293 = vpack.c.b16 %v254, %v251
    %v294 = vpack.c.b16 %v255, %v252
    %v295 = vpack.c.b16 %v256, %v253
    %v296 = vpack.c.b16 %v260, %v257
    %v297 = vpack.c.b16 %v261, %v258
    %v298 = vpack.c.b16 %v262, %v259
    %v299 = vpack.c.b16 %v266, %v263
    %v300 = vpack.c.b16 %v267, %v264
    %v301 = vpack.c.b16 %v268, %v265
    %v302 = vpack.c.b16 %v272, %v269
    %v303 = vpack.c.b16 %v273, %v270
    %v304 = vpack.c.b16 %v274, %v271
    %v305 = vpack.c.b16 %v278, %v275
    %v306 = vpack.c.b16 %v279, %v276
    %v307 = vpack.c.b16 %v280, %v277
    %v308 = vpack.c.b16 %v284, %v281
    %v309 = vpack.c.b16 %v285, %v282
    %v310 = vpack.c.b16 %v286, %v283
    %335 = vmatpush.bf16.msra.mxu0 %v308
    %336 = vmatpush.bf16.msra.mxu0 %v305
    %337 = vmatpush.bf16.msra.mxu0 %v302
    %338 = vmatpush.bf16.msra.mxu0 %v299
    %339 = vmatpush.bf16.msra.mxu0 %v296
    %340 = vmatpush.bf16.msra.mxu0 %v293
    %341 = vmatpush.bf16.msra.mxu0 %v290
    %342 = vmatpush.bf16.msra.mxu0 %v287
    %343 = vmatmul.bf16.gmra.mxu0 %v166
    %v344 = vpop.f32.mrf.mxu0
    %v345 = vadd.f32 %v201, %v344
    %v346 = vpop.f32.mrf.mxu0
    %v347 = vadd.f32 %v201, %v346
    %348 = vdwg.mxu0
    %349 = vmatpush.bf16.msra.mxu0 %v309
    %350 = vmatpush.bf16.msra.mxu0 %v306
    %351 = vmatpush.bf16.msra.mxu0 %v303
    %352 = vmatpush.bf16.msra.mxu0 %v300
    %353 = vmatpush.bf16.msra.mxu0 %v297
    %354 = vmatpush.bf16.msra.mxu0 %v294
    %355 = vmatpush.bf16.msra.mxu0 %v291
    %356 = vmatpush.bf16.msra.mxu0 %v288
    %357 = vmatmul.bf16.gmra.mxu0 %v166
    %v358 = vpop.f32.mrf.mxu0
    %v359 = vadd.f32 %v202, %v358
    %v360 = vpop.f32.mrf.mxu0
    %v361 = vadd.f32 %v202, %v360
    %362 = vdwg.mxu0
    %363 = vmatpush.bf16.msra.mxu0 %v310
    %364 = vmatpush.bf16.msra.mxu0 %v307
    %365 = vmatpush.bf16.msra.mxu0 %v304
    %366 = vmatpush.bf16.msra.mxu0 %v301
    %367 = vmatpush.bf16.msra.mxu0 %v298
    %368 = vmatpush.bf16.msra.mxu0 %v295
    %369 = vmatpush.bf16.msra.mxu0 %v292
    %370 = vmatpush.bf16.msra.mxu0 %v289
    %371 = vmatmul.bf16.gmra.mxu0 %v166
    %v372 = vpop.f32.mrf.mxu0
    %v373 = vadd.f32 %v203, %v372
    %v374 = vpop.f32.mrf.mxu0
    %v375 = vadd.f32 %v203, %v374
    %376 = vdwg.mxu0
    %v377 = vmul.f32 %v345, 0.17677669
    %v378 = vmul.f32 %v347, 0.17677669
    %v379 = vpack.c.bf16 %v377, %v377
    %v380 = vpack.c.bf16 %v378, %v378
    %v381 = vpack.c.bf16 %v359, %v359
    %v382 = vpack.c.bf16 %v361, %v361
    %v383 = vpack.c.bf16 %v373, %v373
    %v384 = vpack.c.bf16 %v375, %v375
    %v385 = vld [vmem:[#allocation8] sm:$0xff]
    %v386 = vld [vmem:[#allocation8 + $0x8] sm:$0xff]
    %vm387 = vcmp.eq.s32.totalorder %v385, 0
    %vm388 = vcmp.eq.s32.totalorder %v386, 0
    %v389 = vsel %vm387, -1e+09, 0.0
    %v390 = vsel %vm388, -1e+09, 0.0
    %vm391 = vcmask 261120
    %v393 = vsel %vm391, %v379, 0
    %v396 = vsel %vm391, %v381, 0
    %398 = vmatpush.bf16.xpose.msra.mxu0 0
    %399 = vmatpush.bf16.xpose.msra.mxu0 0
    %400 = vmatpush.bf16.xpose.msra.mxu0 0
    %401 = vmatpush.bf16.xpose.msra.mxu0 0
    %402 = vmatpush.bf16.xpose.msra.mxu0 0
    %403 = vmatpush.bf16.xpose.msra.mxu0 0
    %404 = vmatpush.bf16.xpose.msra.mxu0 0
    %405 = vmatpush.bf16.xpose.msra.mxu0 %v396
    %406 = vmatmul.bf16.gmra.mxu0 %v393
    %v407 = vpop.f32.mrf.mxu0
    %v408 = vadd.f32 0.0, %v407
    %v409 = vpop.f32.mrf.mxu0
    %410 = vdwg.mxu0
    %v412 = vsel %vm391, %v380, 0
    %v415 = vsel %vm391, %v382, 0
    %417 = vmatpush.bf16.xpose.msra.mxu0 0
    %418 = vmatpush.bf16.xpose.msra.mxu0 0
    %419 = vmatpush.bf16.xpose.msra.mxu0 0
    %420 = vmatpush.bf16.xpose.msra.mxu0 0
    %421 = vmatpush.bf16.xpose.msra.mxu0 0
    %422 = vmatpush.bf16.xpose.msra.mxu0 0
    %423 = vmatpush.bf16.xpose.msra.mxu0 0
    %424 = vmatpush.bf16.xpose.msra.mxu0 %v415
    %425 = vmatmul.bf16.gmra.mxu0 %v412
    %v426 = vpop.f32.mrf.mxu0
    %v427 = vadd.f32 0.0, %v426
    %v428 = vpop.f32.mrf.mxu0
    %429 = vdwg.mxu0
    %vm430 = vcmask 64512
    %431 = vst.msk [vmem:[%s15] sm:$0xff] %vm430, %v408
    %432 = vst.msk [vmem:[%s15 + $0x8] sm:$0xff] %vm430, %v427
    %v434 = vunpack.c.l.b16 %v379
    %v435 = vpack.c.b16 %v434, %v434
    %436 = vrot.lane.b32.xlu0 %v435, 96
    %v437 = vpop.permute.xlu0 %436
    %v439 = vunpack.c.l.b16 %v381
    %v440 = vpack.c.b16 %v439, %v439
    %441 = vrot.lane.b32.xlu0 %v440, 96
    %v442 = vpop.permute.xlu0 %441
    %v444 = vsel %vm391, %v437, 0
    %v447 = vsel %vm391, %v442, 0
    %449 = vmatpush.bf16.xpose.msra.mxu0 0
    %450 = vmatpush.bf16.xpose.msra.mxu0 0
    %451 = vmatpush.bf16.xpose.msra.mxu0 0
    %452 = vmatpush.bf16.xpose.msra.mxu0 0
    %453 = vmatpush.bf16.xpose.msra.mxu0 0
    %454 = vmatpush.bf16.xpose.msra.mxu0 0
    %455 = vmatpush.bf16.xpose.msra.mxu0 0
    %456 = vmatpush.bf16.xpose.msra.mxu0 %v447
    %457 = vmatmul.bf16.gmra.mxu0 %v444
    %v458 = vpop.f32.mrf.mxu0
    %v459 = vadd.f32 0.0, %v458
    %v460 = vpop.f32.mrf.mxu0
    %461 = vdwg.mxu0
    %v463 = vunpack.c.l.b16 %v380
    %v464 = vpack.c.b16 %v463, %v463
    %465 = vrot.lane.b32.xlu0 %v464, 96
    %v466 = vpop.permute.xlu0 %465
    %v468 = vunpack.c.l.b16 %v382
    %v469 = vpack.c.b16 %v468, %v468
    %470 = vrot.lane.b32.xlu0 %v469, 96
    %v471 = vpop.permute.xlu0 %470
    %v473 = vsel %vm391, %v466, 0
    %v476 = vsel %vm391, %v471, 0
    %478 = vmatpush.bf16.xpose.msra.mxu0 0
    %479 = vmatpush.bf16.xpose.msra.mxu0 0
    %480 = vmatpush.bf16.xpose.msra.mxu0 0
    %481 = vmatpush.bf16.xpose.msra.mxu0 0
    %482 = vmatpush.bf16.xpose.msra.mxu0 0
    %483 = vmatpush.bf16.xpose.msra.mxu0 0
    %484 = vmatpush.bf16.xpose.msra.mxu0 0
    %485 = vmatpush.bf16.xpose.msra.mxu0 %v476
    %486 = vmatmul.bf16.gmra.mxu0 %v473
    %v487 = vpop.f32.mrf.mxu0
    %v488 = vadd.f32 0.0, %v487
    %v489 = vpop.f32.mrf.mxu0
    %490 = vdwg.mxu0
    %s491 = scalar_lea.vmem %s15, 16
    %492 = vst.msk [vmem:[%s491] sm:$0xff] %vm430, %v459
    %493 = vst.msk [vmem:[%s491 + $0x8] sm:$0xff] %vm430, %v488
    %494 = vrot.lane.b32.xlu0 %v435, 64
    %v495 = vpop.permute.xlu0 %494
    %496 = vrot.lane.b32.xlu0 %v440, 64
    %v497 = vpop.permute.xlu0 %496
    %v499 = vsel %vm391, %v495, 0
    %v502 = vsel %vm391, %v497, 0
    %504 = vmatpush.bf16.xpose.msra.mxu0 0
    %505 = vmatpush.bf16.xpose.msra.mxu0 0
    %506 = vmatpush.bf16.xpose.msra.mxu0 0
    %507 = vmatpush.bf16.xpose.msra.mxu0 0
    %508 = vmatpush.bf16.xpose.msra.mxu0 0
    %509 = vmatpush.bf16.xpose.msra.mxu0 0
    %510 = vmatpush.bf16.xpose.msra.mxu0 0
    %511 = vmatpush.bf16.xpose.msra.mxu0 %v502
    %512 = vmatmul.bf16.gmra.mxu0 %v499
    %v513 = vpop.f32.mrf.mxu0
    %v514 = vadd.f32 0.0, %v513
    %v515 = vpop.f32.mrf.mxu0
    %516 = vdwg.mxu0
    %517 = vrot.lane.b32.xlu0 %v464, 64
    %v518 = vpop.permute.xlu0 %517
    %519 = vrot.lane.b32.xlu0 %v469, 64
    %v520 = vpop.permute.xlu0 %519
    %v522 = vsel %vm391, %v518, 0
    %v525 = vsel %vm391, %v520, 0
    %527 = vmatpush.bf16.xpose.msra.mxu0 0
    %528 = vmatpush.bf16.xpose.msra.mxu0 0
    %529 = vmatpush.bf16.xpose.msra.mxu0 0
    %530 = vmatpush.bf16.xpose.msra.mxu0 0
    %531 = vmatpush.bf16.xpose.msra.mxu0 0
    %532 = vmatpush.bf16.xpose.msra.mxu0 0
    %533 = vmatpush.bf16.xpose.msra.mxu0 0
    %534 = vmatpush.bf16.xpose.msra.mxu0 %v525
    %535 = vmatmul.bf16.gmra.mxu0 %v522
    %v536 = vpop.f32.mrf.mxu0
    %v537 = vadd.f32 0.0, %v536
    %v538 = vpop.f32.mrf.mxu0
    %539 = vdwg.mxu0
    %s540 = scalar_lea.vmem %s15, 32
    %541 = vst.msk [vmem:[%s540] sm:$0xff] %vm430, %v514
    %542 = vst.msk [vmem:[%s540 + $0x8] sm:$0xff] %vm430, %v537
    %543 = vrot.lane.b32.xlu0 %v435, 32
    %v544 = vpop.permute.xlu0 %543
    %545 = vrot.lane.b32.xlu0 %v440, 32
    %v546 = vpop.permute.xlu0 %545
    %v548 = vsel %vm391, %v544, 0
    %v551 = vsel %vm391, %v546, 0
    %553 = vmatpush.bf16.xpose.msra.mxu0 0
    %554 = vmatpush.bf16.xpose.msra.mxu0 0
    %555 = vmatpush.bf16.xpose.msra.mxu0 0
    %556 = vmatpush.bf16.xpose.msra.mxu0 0
    %557 = vmatpush.bf16.xpose.msra.mxu0 0
    %558 = vmatpush.bf16.xpose.msra.mxu0 0
    %559 = vmatpush.bf16.xpose.msra.mxu0 0
    %560 = vmatpush.bf16.xpose.msra.mxu0 %v551
    %561 = vmatmul.bf16.gmra.mxu0 %v548
    %v562 = vpop.f32.mrf.mxu0
    %v563 = vadd.f32 0.0, %v562
    %v564 = vpop.f32.mrf.mxu0
    %565 = vdwg.mxu0
    %566 = vrot.lane.b32.xlu0 %v464, 32
    %v567 = vpop.permute.xlu0 %566
    %568 = vrot.lane.b32.xlu0 %v469, 32
    %v569 = vpop.permute.xlu0 %568
    %v571 = vsel %vm391, %v567, 0
    %v574 = vsel %vm391, %v569, 0
    %576 = vmatpush.bf16.xpose.msra.mxu0 0
    %577 = vmatpush.bf16.xpose.msra.mxu0 0
    %578 = vmatpush.bf16.xpose.msra.mxu0 0
    %579 = vmatpush.bf16.xpose.msra.mxu0 0
    %580 = vmatpush.bf16.xpose.msra.mxu0 0
    %581 = vmatpush.bf16.xpose.msra.mxu0 0
    %582 = vmatpush.bf16.xpose.msra.mxu0 0
    %583 = vmatpush.bf16.xpose.msra.mxu0 %v574
    %584 = vmatmul.bf16.gmra.mxu0 %v571
    %v585 = vpop.f32.mrf.mxu0
    %v586 = vadd.f32 0.0, %v585
    %v587 = vpop.f32.mrf.mxu0
    %588 = vdwg.mxu0
    %s589 = scalar_lea.vmem %s15, 48
    %590 = vst.msk [vmem:[%s589] sm:$0xff] %vm430, %v563
    %591 = vst.msk [vmem:[%s589 + $0x8] sm:$0xff] %vm430, %v586
    %v592 = vld [vmem:[%s15] sm:$0xff]
    %v593 = vld [vmem:[%s15 + $0x8] sm:$0xff]
    %v594 = vld [vmem:[%s15 + $0x10] sm:$0xff]
    %v595 = vld [vmem:[%s15 + $0x18] sm:$0xff]
    %v596 = vld [vmem:[%s15 + $0x20] sm:$0xff]
    %v597 = vld [vmem:[%s15 + $0x28] sm:$0xff]
    %v598 = vld [vmem:[%s15 + $0x30] sm:$0xff]
    %v599 = vld [vmem:[%s15 + $0x38] sm:$0xff]
    %v600 = vadd.f32 %v592, %v389
    %v601 = vadd.f32 %v593, %v390
    %v602 = vadd.f32 %v594, %v389
    %v603 = vadd.f32 %v595, %v390
    %v604 = vadd.f32 %v596, %v389
    %v605 = vadd.f32 %v597, %v390
    %v606 = vadd.f32 %v598, %v389
    %v607 = vadd.f32 %v599, %v390
    %v608 = vsel %vm430, %v600, -inf
    %609 = vmax.xlane.f32.xlu0 %v608
    %v610 = vpop.xlane.xlu0 %609
    %v611 = vsel %vm430, %v601, -inf
    %612 = vmax.xlane.f32.xlu0 %v611
    %v613 = vpop.xlane.xlu0 %612
    %v614 = vsel %vm430, %v602, -inf
    %615 = vmax.xlane.f32.xlu0 %v614
    %v616 = vpop.xlane.xlu0 %615
    %v617 = vsel %vm430, %v603, -inf
    %618 = vmax.xlane.f32.xlu0 %v617
    %v619 = vpop.xlane.xlu0 %618
    %v620 = vsel %vm430, %v604, -inf
    %621 = vmax.xlane.f32.xlu0 %v620
    %v622 = vpop.xlane.xlu0 %621
    %v623 = vsel %vm430, %v605, -inf
    %624 = vmax.xlane.f32.xlu0 %v623
    %v625 = vpop.xlane.xlu0 %624
    %v626 = vsel %vm430, %v606, -inf
    %627 = vmax.xlane.f32.xlu0 %v626
    %v628 = vpop.xlane.xlu0 %627
    %v629 = vsel %vm430, %v607, -inf
    %630 = vmax.xlane.f32.xlu0 %v629
    %v631 = vpop.xlane.xlu0 %630
    %v632 = vsub.f32 %v600, %v610
    %v633 = vsub.f32 %v601, %v613
    %v634 = vsub.f32 %v602, %v616
    %v635 = vsub.f32 %v603, %v619
    %v636 = vsub.f32 %v604, %v622
    %v637 = vsub.f32 %v605, %v625
    %v638 = vsub.f32 %v606, %v628
    %v639 = vsub.f32 %v607, %v631
    %v640 = vmul.f32 %v632, 1.442695
    %v641 = vpow.pop %v640
    %v642 = vmul.f32 %v633, 1.442695
    %v643 = vpow.pop %v642
    %v644 = vmul.f32 %v634, 1.442695
    %v645 = vpow.pop %v644
    %v646 = vmul.f32 %v635, 1.442695
    %v647 = vpow.pop %v646
    %v648 = vmul.f32 %v636, 1.442695
    %v649 = vpow.pop %v648
    %v650 = vmul.f32 %v637, 1.442695
    %v651 = vpow.pop %v650
    %v652 = vmul.f32 %v638, 1.442695
    %v653 = vpow.pop %v652
    %v654 = vmul.f32 %v639, 1.442695
    %v655 = vpow.pop %v654
    %v656 = vsel %vm430, %v641, 0.0
    %657 = vadd.xlane.f32.xlu0 %v656
    %v658 = vpop.xlane.xlu0 %657
    %v659 = vsel %vm430, %v643, 0.0
    %660 = vadd.xlane.f32.xlu0 %v659
    %v661 = vpop.xlane.xlu0 %660
    %v662 = vsel %vm430, %v645, 0.0
    %663 = vadd.xlane.f32.xlu0 %v662
    %v664 = vpop.xlane.xlu0 %663
    %v665 = vsel %vm430, %v647, 0.0
    %666 = vadd.xlane.f32.xlu0 %v665
    %v667 = vpop.xlane.xlu0 %666
    %v668 = vsel %vm430, %v649, 0.0
    %669 = vadd.xlane.f32.xlu0 %v668
    %v670 = vpop.xlane.xlu0 %669
    %v671 = vsel %vm430, %v651, 0.0
    %672 = vadd.xlane.f32.xlu0 %v671
    %v673 = vpop.xlane.xlu0 %672
    %v674 = vsel %vm430, %v653, 0.0
    %675 = vadd.xlane.f32.xlu0 %v674
    %v676 = vpop.xlane.xlu0 %675
    %v677 = vsel %vm430, %v655, 0.0
    %678 = vadd.xlane.f32.xlu0 %v677
    %v679 = vpop.xlane.xlu0 %678
    %v680 = vrcp.pop %v658
    %v681 = vrcp.pop %v661
    %v682 = vrcp.pop %v664
    %v683 = vrcp.pop %v667
    %v684 = vrcp.pop %v670
    %v685 = vrcp.pop %v673
    %v686 = vrcp.pop %v676
    %v687 = vrcp.pop %v679
    %v688 = vmul.f32 %v641, %v680
    %v689 = vmul.f32 %v643, %v681
    %v690 = vmul.f32 %v645, %v682
    %v691 = vmul.f32 %v647, %v683
    %v692 = vmul.f32 %v649, %v684
    %v693 = vmul.f32 %v651, %v685
    %v694 = vmul.f32 %v653, %v686
    %v695 = vmul.f32 %v655, %v687
    %696 = vst.msk [vmem:[%s15] sm:$0xff] %vm430, %v688
    %697 = vst.msk [vmem:[%s15 + $0x8] sm:$0xff] %vm430, %v689
    %698 = vst.msk [vmem:[%s15 + $0x10] sm:$0xff] %vm430, %v690
    %699 = vst.msk [vmem:[%s15 + $0x18] sm:$0xff] %vm430, %v691
    %700 = vst.msk [vmem:[%s15 + $0x20] sm:$0xff] %vm430, %v692
    %701 = vst.msk [vmem:[%s15 + $0x28] sm:$0xff] %vm430, %v693
    %702 = vst.msk [vmem:[%s15 + $0x30] sm:$0xff] %vm430, %v694
    %703 = vst.msk [vmem:[%s15 + $0x38] sm:$0xff] %vm430, %v695
    %v704 = vpack.c.bf16 %v688, %v688
    %v705 = vpack.c.bf16 %v689, %v689
    %v706 = vpack.c.bf16 %v690, %v690
    %v707 = vpack.c.bf16 %v691, %v691
    %v708 = vpack.c.bf16 %v692, %v692
    %v709 = vpack.c.bf16 %v693, %v693
    %v710 = vpack.c.bf16 %v694, %v694
    %v711 = vpack.c.bf16 %v695, %v695
    %v712 = vld [vmem:[%s5] sm:$0x1]
    %v714 = vsel %vm430, %v704, 0
    %vm716 = vcmask 1043456
    %v718 = vsel %vm716, %v383, 0
    %720 = vmatpush.bf16.msra.mxu0 0
    %721 = vmatpush.bf16.msra.mxu0 0
    %722 = vmatpush.bf16.msra.mxu0 0
    %723 = vmatpush.bf16.msra.mxu0 0
    %724 = vmatpush.bf16.msra.mxu0 0
    %725 = vmatpush.bf16.msra.mxu0 0
    %726 = vmatpush.bf16.msra.mxu0 0
    %727 = vmatpush.bf16.msra.mxu0 %v718
    %728 = vmatmul.bf16.gmra.mxu0 %v714
    %v729 = vpop.f32.mrf.mxu0
    %v730 = vadd.f32 0.0, %v729
    %v731 = vpop.f32.mrf.mxu0
    %732 = vdwg.mxu0
    %v734 = vsel %vm430, %v705, 0
    %v737 = vsel %vm716, %v384, 0
    %739 = vmatpush.bf16.msra.mxu0 0
    %740 = vmatpush.bf16.msra.mxu0 0
    %741 = vmatpush.bf16.msra.mxu0 0
    %742 = vmatpush.bf16.msra.mxu0 0
    %743 = vmatpush.bf16.msra.mxu0 0
    %744 = vmatpush.bf16.msra.mxu0 0
    %745 = vmatpush.bf16.msra.mxu0 0
    %746 = vmatpush.bf16.msra.mxu0 %v737
    %747 = vmatmul.bf16.gmra.mxu0 %v734
    %v748 = vpop.f32.mrf.mxu0
    %v749 = vadd.f32 0.0, %v748
    %v750 = vpop.f32.mrf.mxu0
    %751 = vdwg.mxu0
    %v752 = vpack.c.bf16 %v749, %v730
    %v753 = vld [vmem:[#allocation11] sm:$0xf]
    %v754 = vld [vmem:[#allocation11 + $0x4] sm:$0xf]
    %v755 = vld [vmem:[#allocation11 + $0x8] sm:$0xf]
    %v756 = vld [vmem:[#allocation11 + $0xc] sm:$0xf]
    %v761 = vunpack.c.l.b16 %v753
    %v762 = vunpack.c.l.b16 %v754
    %v763 = vunpack.c.l.b16 %v755
    %v764 = vunpack.c.l.b16 %v756
    %v765 = vpack.c.b16 %v762, %v761
    %v766 = vpack.c.b16 %v764, %v763
    %v770 = vsel %vm391, %v752, 0
    %772 = vmatpush.bf16.msra.mxu0 0
    %773 = vmatpush.bf16.msra.mxu0 0
    %774 = vmatpush.bf16.msra.mxu0 0
    %775 = vmatpush.bf16.msra.mxu0 0
    %776 = vmatpush.bf16.msra.mxu0 0
    %777 = vmatpush.bf16.msra.mxu0 0
    %778 = vmatpush.bf16.msra.mxu0 %v766
    %779 = vmatpush.bf16.msra.mxu0 %v765
    %780 = vmatmul.bf16.gmra.mxu0 %v770
    %v781 = vpop.f32.mrf.mxu0
    %v782 = vadd.f32 0.0, %v781
    %v783 = vpop.f32.mrf.mxu0
    %v784 = vadd.f32 0.0, %v783
    %785 = vdwg.mxu0
    %v787 = vperm.slane %v712, 0
    %v789 = vadd.f32 %v787, %v782
    %v790 = vadd.f32 %v787, %v784
    %v792 = vunpack.c.l.b16 %v383
    %v793 = vpack.c.b16 %v792, %v792
    %794 = vrot.lane.b32.xlu0 %v793, 96
    %v795 = vpop.permute.xlu0 %794
    %v797 = vsel %vm430, %v706, 0
    %v800 = vsel %vm716, %v795, 0
    %802 = vmatpush.bf16.msra.mxu0 0
    %803 = vmatpush.bf16.msra.mxu0 0
    %804 = vmatpush.bf16.msra.mxu0 0
    %805 = vmatpush.bf16.msra.mxu0 0
    %806 = vmatpush.bf16.msra.mxu0 0
    %807 = vmatpush.bf16.msra.mxu0 0
    %808 = vmatpush.bf16.msra.mxu0 0
    %809 = vmatpush.bf16.msra.mxu0 %v800
    %810 = vmatmul.bf16.gmra.mxu0 %v797
    %v811 = vpop.f32.mrf.mxu0
    %v812 = vadd.f32 0.0, %v811
    %v813 = vpop.f32.mrf.mxu0
    %814 = vdwg.mxu0
    %v816 = vunpack.c.l.b16 %v384
    %v817 = vpack.c.b16 %v816, %v816
    %818 = vrot.lane.b32.xlu0 %v817, 96
    %v819 = vpop.permute.xlu0 %818
    %v821 = vsel %vm430, %v707, 0
    %v824 = vsel %vm716, %v819, 0
    %826 = vmatpush.bf16.msra.mxu0 0
    %827 = vmatpush.bf16.msra.mxu0 0
    %828 = vmatpush.bf16.msra.mxu0 0
    %829 = vmatpush.bf16.msra.mxu0 0
    %830 = vmatpush.bf16.msra.mxu0 0
    %831 = vmatpush.bf16.msra.mxu0 0
    %832 = vmatpush.bf16.msra.mxu0 0
    %833 = vmatpush.bf16.msra.mxu0 %v824
    %834 = vmatmul.bf16.gmra.mxu0 %v821
    %v835 = vpop.f32.mrf.mxu0
    %v836 = vadd.f32 0.0, %v835
    %v837 = vpop.f32.mrf.mxu0
    %838 = vdwg.mxu0
    %v839 = vpack.c.bf16 %v836, %v812
    %v840 = vld [vmem:[#allocation11 + $0x10] sm:$0xf]
    %v841 = vld [vmem:[#allocation11 + $0x14] sm:$0xf]
    %v842 = vld [vmem:[#allocation11 + $0x18] sm:$0xf]
    %v843 = vld [vmem:[#allocation11 + $0x1c] sm:$0xf]
    %v848 = vunpack.c.l.b16 %v840
    %v849 = vunpack.c.l.b16 %v841
    %v850 = vunpack.c.l.b16 %v842
    %v851 = vunpack.c.l.b16 %v843
    %v852 = vpack.c.b16 %v849, %v848
    %v853 = vpack.c.b16 %v851, %v850
    %v857 = vsel %vm391, %v839, 0
    %859 = vmatpush.bf16.msra.mxu0 0
    %860 = vmatpush.bf16.msra.mxu0 0
    %861 = vmatpush.bf16.msra.mxu0 0
    %862 = vmatpush.bf16.msra.mxu0 0
    %863 = vmatpush.bf16.msra.mxu0 0
    %864 = vmatpush.bf16.msra.mxu0 0
    %865 = vmatpush.bf16.msra.mxu0 %v853
    %866 = vmatpush.bf16.msra.mxu0 %v852
    %867 = vmatmul.bf16.gmra.mxu0 %v857
    %v868 = vpop.f32.mrf.mxu0
    %v869 = vadd.f32 0.0, %v868
    %v870 = vpop.f32.mrf.mxu0
    %v871 = vadd.f32 0.0, %v870
    %872 = vdwg.mxu0
    %v873 = vadd.f32 %v789, %v869
    %v874 = vadd.f32 %v790, %v871
    %875 = vrot.lane.b32.xlu0 %v793, 64
    %v876 = vpop.permute.xlu0 %875
    %v878 = vsel %vm430, %v708, 0
    %v881 = vsel %vm716, %v876, 0
    %883 = vmatpush.bf16.msra.mxu0 0
    %884 = vmatpush.bf16.msra.mxu0 0
    %885 = vmatpush.bf16.msra.mxu0 0
    %886 = vmatpush.bf16.msra.mxu0 0
    %887 = vmatpush.bf16.msra.mxu0 0
    %888 = vmatpush.bf16.msra.mxu0 0
    %889 = vmatpush.bf16.msra.mxu0 0
    %890 = vmatpush.bf16.msra.mxu0 %v881
    %891 = vmatmul.bf16.gmra.mxu0 %v878
    %v892 = vpop.f32.mrf.mxu0
    %v893 = vadd.f32 0.0, %v892
    %v894 = vpop.f32.mrf.mxu0
    %895 = vdwg.mxu0
    %896 = vrot.lane.b32.xlu0 %v817, 64
    %v897 = vpop.permute.xlu0 %896
    %v899 = vsel %vm430, %v709, 0
    %v902 = vsel %vm716, %v897, 0
    %904 = vmatpush.bf16.msra.mxu0 0
    %905 = vmatpush.bf16.msra.mxu0 0
    %906 = vmatpush.bf16.msra.mxu0 0
    %907 = vmatpush.bf16.msra.mxu0 0
    %908 = vmatpush.bf16.msra.mxu0 0
    %909 = vmatpush.bf16.msra.mxu0 0
    %910 = vmatpush.bf16.msra.mxu0 0
    %911 = vmatpush.bf16.msra.mxu0 %v902
    %912 = vmatmul.bf16.gmra.mxu0 %v899
    %v913 = vpop.f32.mrf.mxu0
    %v914 = vadd.f32 0.0, %v913
    %v915 = vpop.f32.mrf.mxu0
    %916 = vdwg.mxu0
    %v917 = vpack.c.bf16 %v914, %v893
    %v918 = vld [vmem:[#allocation11 + $0x20] sm:$0xf]
    %v919 = vld [vmem:[#allocation11 + $0x24] sm:$0xf]
    %v920 = vld [vmem:[#allocation11 + $0x28] sm:$0xf]
    %v921 = vld [vmem:[#allocation11 + $0x2c] sm:$0xf]
    %v926 = vunpack.c.l.b16 %v918
    %v927 = vunpack.c.l.b16 %v919
    %v928 = vunpack.c.l.b16 %v920
    %v929 = vunpack.c.l.b16 %v921
    %v930 = vpack.c.b16 %v927, %v926
    %v931 = vpack.c.b16 %v929, %v928
    %v935 = vsel %vm391, %v917, 0
    %937 = vmatpush.bf16.msra.mxu0 0
    %938 = vmatpush.bf16.msra.mxu0 0
    %939 = vmatpush.bf16.msra.mxu0 0
    %940 = vmatpush.bf16.msra.mxu0 0
    %941 = vmatpush.bf16.msra.mxu0 0
    %942 = vmatpush.bf16.msra.mxu0 0
    %943 = vmatpush.bf16.msra.mxu0 %v931
    %944 = vmatpush.bf16.msra.mxu0 %v930
    %945 = vmatmul.bf16.gmra.mxu0 %v935
    %v946 = vpop.f32.mrf.mxu0
    %v947 = vadd.f32 0.0, %v946
    %v948 = vpop.f32.mrf.mxu0
    %v949 = vadd.f32 0.0, %v948
    %950 = vdwg.mxu0
    %v951 = vadd.f32 %v873, %v947
    %v952 = vadd.f32 %v874, %v949
    %953 = vrot.lane.b32.xlu0 %v793, 32
    %v954 = vpop.permute.xlu0 %953
    %v956 = vsel %vm430, %v710, 0
    %v959 = vsel %vm716, %v954, 0
    %961 = vmatpush.bf16.msra.mxu0 0
    %962 = vmatpush.bf16.msra.mxu0 0
    %963 = vmatpush.bf16.msra.mxu0 0
    %964 = vmatpush.bf16.msra.mxu0 0
    %965 = vmatpush.bf16.msra.mxu0 0
    %966 = vmatpush.bf16.msra.mxu0 0
    %967 = vmatpush.bf16.msra.mxu0 0
    %968 = vmatpush.bf16.msra.mxu0 %v959
    %969 = vmatmul.bf16.gmra.mxu0 %v956
    %v970 = vpop.f32.mrf.mxu0
    %v971 = vadd.f32 0.0, %v970
    %v972 = vpop.f32.mrf.mxu0
    %973 = vdwg.mxu0
    %974 = vrot.lane.b32.xlu0 %v817, 32
    %v975 = vpop.permute.xlu0 %974
    %v977 = vsel %vm430, %v711, 0
    %v980 = vsel %vm716, %v975, 0
    %982 = vmatpush.bf16.msra.mxu0 0
    %983 = vmatpush.bf16.msra.mxu0 0
    %984 = vmatpush.bf16.msra.mxu0 0
    %985 = vmatpush.bf16.msra.mxu0 0
    %986 = vmatpush.bf16.msra.mxu0 0
    %987 = vmatpush.bf16.msra.mxu0 0
    %988 = vmatpush.bf16.msra.mxu0 0
    %989 = vmatpush.bf16.msra.mxu0 %v980
    %990 = vmatmul.bf16.gmra.mxu0 %v977
    %v991 = vpop.f32.mrf.mxu0
    %v992 = vadd.f32 0.0, %v991
    %v993 = vpop.f32.mrf.mxu0
    %994 = vdwg.mxu0
    %v995 = vpack.c.bf16 %v992, %v971
    %v996 = vld [vmem:[#allocation11 + $0x30] sm:$0xf]
    %v997 = vld [vmem:[#allocation11 + $0x34] sm:$0xf]
    %v998 = vld [vmem:[#allocation11 + $0x38] sm:$0xf]
    %v999 = vld [vmem:[#allocation11 + $0x3c] sm:$0xf]
    %v1004 = vunpack.c.l.b16 %v996
    %v1005 = vunpack.c.l.b16 %v997
    %v1006 = vunpack.c.l.b16 %v998
    %v1007 = vunpack.c.l.b16 %v999
    %v1008 = vpack.c.b16 %v1005, %v1004
    %v1009 = vpack.c.b16 %v1007, %v1006
    %v1013 = vsel %vm391, %v995, 0
    %1015 = vmatpush.bf16.msra.mxu0 0
    %1016 = vmatpush.bf16.msra.mxu0 0
    %1017 = vmatpush.bf16.msra.mxu0 0
    %1018 = vmatpush.bf16.msra.mxu0 0
    %1019 = vmatpush.bf16.msra.mxu0 0
    %1020 = vmatpush.bf16.msra.mxu0 0
    %1021 = vmatpush.bf16.msra.mxu0 %v1009
    %1022 = vmatpush.bf16.msra.mxu0 %v1008
    %1023 = vmatmul.bf16.gmra.mxu0 %v1013
    %v1024 = vpop.f32.mrf.mxu0
    %v1025 = vadd.f32 0.0, %v1024
    %v1026 = vpop.f32.mrf.mxu0
    %v1027 = vadd.f32 0.0, %v1026
    %1028 = vdwg.mxu0
    %v1029 = vadd.f32 %v951, %v1025
    %v1030 = vadd.f32 %v952, %v1027
    %v1031 = vadd.f32 %v164, %v1029
    %v1032 = vadd.f32 %v165, %v1030
    %v1033 = vld [vmem:[%s6] sm:$0x1]
    %v1034 = vld [vmem:[%s7] sm:$0x1]
    %1035 = vadd.xlane.f32.xlu0 %v1031
    %v1036 = vpop.xlane.xlu0 %1035
    %1037 = vadd.xlane.f32.xlu0 %v1032
    %v1038 = vpop.xlane.xlu0 %1037
    %v1039 = vrcp.pop 128.0
    %v1040 = vmul.f32 128.0, %v1039
    %v1041 = vsub.f32 1.0, %v1040
    %v1042 = vmul.f32 %v1039, %v1041
    %v1043 = vadd.f32 %v1039, %v1042
    %vm1044 = vweird.f32 %v1039
    %v1045 = vsel %vm1044, %v1039, %v1043
    %v1046 = vmul.f32 %v1036, %v1045
    %v1047 = vmul.f32 %v1038, %v1045
    %v1048 = vsub.f32 %v1031, %v1046
    %v1049 = vsub.f32 %v1032, %v1047
    %v1050 = vmul.f32 %v1048, %v1048
    %v1051 = vmul.f32 %v1049, %v1049
    %1052 = vadd.xlane.f32.xlu0 %v1050
    %v1053 = vpop.xlane.xlu0 %1052
    %1054 = vadd.xlane.f32.xlu0 %v1051
    %v1055 = vpop.xlane.xlu0 %1054
    %v1056 = vmul.f32 %v1053, %v1045
    %v1057 = vmul.f32 %v1055, %v1045
    %v1058 = vadd.f32 %v1056, 1e-05
    %v1059 = vadd.f32 %v1057, 1e-05
    %v1060 = vrsqrt.pop %v1058
    %v1061 = vmul.f32 %v1060, %v1058
    %v1062 = vmul.f32 %v1061, %v1060
    %v1063 = vmul.f32 0.5, %v1062
    %v1064 = vsub.f32 1.5, %v1063
    %v1065 = vmul.f32 %v1060, %v1064
    %vm1066 = vweird.f32 %v1058
    %vm1067 = vweird.f32 %v1060
    %vm1068 = vmor %vm1066, %vm1067
    %v1069 = vsel %vm1068, %v1060, %v1065
    %v1070 = vrsqrt.pop %v1059
    %v1071 = vmul.f32 %v1070, %v1059
    %v1072 = vmul.f32 %v1071, %v1070
    %v1073 = vmul.f32 0.5, %v1072
    %v1074 = vsub.f32 1.5, %v1073
    %v1075 = vmul.f32 %v1070, %v1074
    %vm1076 = vweird.f32 %v1059
    %vm1077 = vweird.f32 %v1070
    %vm1078 = vmor %vm1076, %vm1077
    %v1079 = vsel %vm1078, %v1070, %v1075
    %v1080 = vmul.f32 %v1048, %v1069
    %v1081 = vmul.f32 %v1049, %v1079
    %v1083 = vperm.slane %v1033, 0
    %v1085 = vmul.f32 %v1080, %v1083
    %v1086 = vmul.f32 %v1081, %v1083
    %v1088 = vperm.slane %v1034, 0
    %v1090 = vadd.f32 %v1085, %v1088
    %v1091 = vadd.f32 %v1086, %v1088
    %s1092 = smul.u32 4, 16
    %s1093 = smul.u32 %s1092, 8
    %s1094 = sshll.u32 %s1093, 4
    %1095 = dma.done [#allocation4], %s1094
    %v1096 = vpack.c.bf16 %v1091, %v1090
    %v1097 = vld [vmem:[#allocation2] sm:$0xff]
    %v1098 = vld [vmem:[#allocation2 + $0x8] sm:$0xff]
    %v1099 = vld [vmem:[#allocation2 + $0x10] sm:$0xff]
    %v1100 = vld [vmem:[#allocation2 + $0x18] sm:$0xff]
    %v1101 = vld [vmem:[#allocation2 + $0x20] sm:$0xff]
    %v1102 = vld [vmem:[#allocation2 + $0x28] sm:$0xff]
    %v1103 = vld [vmem:[#allocation2 + $0x30] sm:$0xff]
    %v1104 = vld [vmem:[#allocation2 + $0x38] sm:$0xff]
    %v1105 = vld [vmem:[#allocation2 + $0x40] sm:$0xff]
    %v1106 = vld [vmem:[#allocation2 + $0x48] sm:$0xff]
    %v1107 = vld [vmem:[#allocation2 + $0x50] sm:$0xff]
    %v1108 = vld [vmem:[#allocation2 + $0x58] sm:$0xff]
    %v1109 = vld [vmem:[#allocation2 + $0x60] sm:$0xff]
    %v1110 = vld [vmem:[#allocation2 + $0x68] sm:$0xff]
    %v1111 = vld [vmem:[#allocation2 + $0x70] sm:$0xff]
    %v1112 = vld [vmem:[#allocation2 + $0x78] sm:$0xff]
    %v1113 = vld [vmem:[#allocation2 + $0x80] sm:$0xff]
    %v1114 = vld [vmem:[#allocation2 + $0x88] sm:$0xff]
    %v1115 = vld [vmem:[#allocation2 + $0x90] sm:$0xff]
    %v1116 = vld [vmem:[#allocation2 + $0x98] sm:$0xff]
    %v1117 = vld [vmem:[#allocation2 + $0xa0] sm:$0xff]
    %v1118 = vld [vmem:[#allocation2 + $0xa8] sm:$0xff]
    %v1119 = vld [vmem:[#allocation2 + $0xb0] sm:$0xff]
    %v1120 = vld [vmem:[#allocation2 + $0xb8] sm:$0xff]
    %v1121 = vld [vmem:[#allocation2 + $0xc0] sm:$0xff]
    %v1122 = vld [vmem:[#allocation2 + $0xc8] sm:$0xff]
    %v1123 = vld [vmem:[#allocation2 + $0xd0] sm:$0xff]
    %v1124 = vld [vmem:[#allocation2 + $0xd8] sm:$0xff]
    %v1125 = vld [vmem:[#allocation2 + $0xe0] sm:$0xff]
    %v1126 = vld [vmem:[#allocation2 + $0xe8] sm:$0xff]
    %v1127 = vld [vmem:[#allocation2 + $0xf0] sm:$0xff]
    %v1128 = vld [vmem:[#allocation2 + $0xf8] sm:$0xff]
    %v1129 = vld [vmem:[#allocation2 + $0x100] sm:$0xff]
    %v1130 = vld [vmem:[#allocation2 + $0x108] sm:$0xff]
    %v1131 = vld [vmem:[#allocation2 + $0x110] sm:$0xff]
    %v1132 = vld [vmem:[#allocation2 + $0x118] sm:$0xff]
    %v1133 = vld [vmem:[#allocation2 + $0x120] sm:$0xff]
    %v1134 = vld [vmem:[#allocation2 + $0x128] sm:$0xff]
    %v1135 = vld [vmem:[#allocation2 + $0x130] sm:$0xff]
    %v1136 = vld [vmem:[#allocation2 + $0x138] sm:$0xff]
    %v1137 = vld [vmem:[#allocation2 + $0x140] sm:$0xff]
    %v1138 = vld [vmem:[#allocation2 + $0x148] sm:$0xff]
    %v1139 = vld [vmem:[#allocation2 + $0x150] sm:$0xff]
    %v1140 = vld [vmem:[#allocation2 + $0x158] sm:$0xff]
    %v1141 = vld [vmem:[#allocation2 + $0x160] sm:$0xff]
    %v1142 = vld [vmem:[#allocation2 + $0x168] sm:$0xff]
    %v1143 = vld [vmem:[#allocation2 + $0x170] sm:$0xff]
    %v1144 = vld [vmem:[#allocation2 + $0x178] sm:$0xff]
    %v1145 = vld [vmem:[#allocation2 + $0x180] sm:$0xff]
    %v1146 = vld [vmem:[#allocation2 + $0x188] sm:$0xff]
    %v1147 = vld [vmem:[#allocation2 + $0x190] sm:$0xff]
    %v1148 = vld [vmem:[#allocation2 + $0x198] sm:$0xff]
    %v1149 = vld [vmem:[#allocation2 + $0x1a0] sm:$0xff]
    %v1150 = vld [vmem:[#allocation2 + $0x1a8] sm:$0xff]
    %v1151 = vld [vmem:[#allocation2 + $0x1b0] sm:$0xff]
    %v1152 = vld [vmem:[#allocation2 + $0x1b8] sm:$0xff]
    %v1153 = vld [vmem:[#allocation2 + $0x1c0] sm:$0xff]
    %v1154 = vld [vmem:[#allocation2 + $0x1c8] sm:$0xff]
    %v1155 = vld [vmem:[#allocation2 + $0x1d0] sm:$0xff]
    %v1156 = vld [vmem:[#allocation2 + $0x1d8] sm:$0xff]
    %v1157 = vld [vmem:[#allocation2 + $0x1e0] sm:$0xff]
    %v1158 = vld [vmem:[#allocation2 + $0x1e8] sm:$0xff]
    %v1159 = vld [vmem:[#allocation2 + $0x1f0] sm:$0xff]
    %v1160 = vld [vmem:[#allocation2 + $0x1f8] sm:$0xff]
    %v1161 = vld [vmem:[#allocation13] sm:$0xff]
    %v1163 = vperm.slane %v1161, 0
    %v1164 = vperm.slane %v1161, 1
    %v1165 = vperm.slane %v1161, 2
    %v1166 = vperm.slane %v1161, 3
    %v1167 = vperm.slane %v1161, 4
    %v1168 = vperm.slane %v1161, 5
    %v1169 = vperm.slane %v1161, 6
    %v1170 = vperm.slane %v1161, 7
    %v1243 = vunpack.c.l.b16 %v1097
    %v1244 = vunpack.c.h.b16 %v1097
    %v1245 = vunpack.c.l.b16 %v1098
    %v1246 = vunpack.c.h.b16 %v1098
    %v1247 = vunpack.c.l.b16 %v1099
    %v1248 = vunpack.c.h.b16 %v1099
    %v1249 = vunpack.c.l.b16 %v1100
    %v1250 = vunpack.c.h.b16 %v1100
    %v1251 = vunpack.c.l.b16 %v1101
    %v1252 = vunpack.c.h.b16 %v1101
    %v1253 = vunpack.c.l.b16 %v1102
    %v1254 = vunpack.c.h.b16 %v1102
    %v1255 = vunpack.c.l.b16 %v1103
    %v1256 = vunpack.c.h.b16 %v1103
    %v1257 = vunpack.c.l.b16 %v1104
    %v1258 = vunpack.c.h.b16 %v1104
    %v1259 = vunpack.c.l.b16 %v1105
    %v1260 = vunpack.c.h.b16 %v1105
    %v1261 = vunpack.c.l.b16 %v1106
    %v1262 = vunpack.c.h.b16 %v1106
    %v1263 = vunpack.c.l.b16 %v1107
    %v1264 = vunpack.c.h.b16 %v1107
    %v1265 = vunpack.c.l.b16 %v1108
    %v1266 = vunpack.c.h.b16 %v1108
    %v1267 = vunpack.c.l.b16 %v1109
    %v1268 = vunpack.c.h.b16 %v1109
    %v1269 = vunpack.c.l.b16 %v1110
    %v1270 = vunpack.c.h.b16 %v1110
    %v1271 = vunpack.c.l.b16 %v1111
    %v1272 = vunpack.c.h.b16 %v1111
    %v1273 = vunpack.c.l.b16 %v1112
    %v1274 = vunpack.c.h.b16 %v1112
    %v1275 = vunpack.c.l.b16 %v1113
    %v1276 = vunpack.c.h.b16 %v1113
    %v1277 = vunpack.c.l.b16 %v1114
    %v1278 = vunpack.c.h.b16 %v1114
    %v1279 = vunpack.c.l.b16 %v1115
    %v1280 = vunpack.c.h.b16 %v1115
    %v1281 = vunpack.c.l.b16 %v1116
    %v1282 = vunpack.c.h.b16 %v1116
    %v1283 = vunpack.c.l.b16 %v1117
    %v1284 = vunpack.c.h.b16 %v1117
    %v1285 = vunpack.c.l.b16 %v1118
    %v1286 = vunpack.c.h.b16 %v1118
    %v1287 = vunpack.c.l.b16 %v1119
    %v1288 = vunpack.c.h.b16 %v1119
    %v1289 = vunpack.c.l.b16 %v1120
    %v1290 = vunpack.c.h.b16 %v1120
    %v1291 = vunpack.c.l.b16 %v1121
    %v1292 = vunpack.c.h.b16 %v1121
    %v1293 = vunpack.c.l.b16 %v1122
    %v1294 = vunpack.c.h.b16 %v1122
    %v1295 = vunpack.c.l.b16 %v1123
    %v1296 = vunpack.c.h.b16 %v1123
    %v1297 = vunpack.c.l.b16 %v1124
    %v1298 = vunpack.c.h.b16 %v1124
    %v1299 = vunpack.c.l.b16 %v1125
    %v1300 = vunpack.c.h.b16 %v1125
    %v1301 = vunpack.c.l.b16 %v1126
    %v1302 = vunpack.c.h.b16 %v1126
    %v1303 = vunpack.c.l.b16 %v1127
    %v1304 = vunpack.c.h.b16 %v1127
    %v1305 = vunpack.c.l.b16 %v1128
    %v1306 = vunpack.c.h.b16 %v1128
    %v1307 = vunpack.c.l.b16 %v1129
    %v1308 = vunpack.c.h.b16 %v1129
    %v1309 = vunpack.c.l.b16 %v1130
    %v1310 = vunpack.c.h.b16 %v1130
    %v1311 = vunpack.c.l.b16 %v1131
    %v1312 = vunpack.c.h.b16 %v1131
    %v1313 = vunpack.c.l.b16 %v1132
    %v1314 = vunpack.c.h.b16 %v1132
    %v1315 = vunpack.c.l.b16 %v1133
    %v1316 = vunpack.c.h.b16 %v1133
    %v1317 = vunpack.c.l.b16 %v1134
    %v1318 = vunpack.c.h.b16 %v1134
    %v1319 = vunpack.c.l.b16 %v1135
    %v1320 = vunpack.c.h.b16 %v1135
    %v1321 = vunpack.c.l.b16 %v1136
    %v1322 = vunpack.c.h.b16 %v1136
    %v1323 = vunpack.c.l.b16 %v1137
    %v1324 = vunpack.c.h.b16 %v1137
    %v1325 = vunpack.c.l.b16 %v1138
    %v1326 = vunpack.c.h.b16 %v1138
    %v1327 = vunpack.c.l.b16 %v1139
    %v1328 = vunpack.c.h.b16 %v1139
    %v1329 = vunpack.c.l.b16 %v1140
    %v1330 = vunpack.c.h.b16 %v1140
    %v1331 = vunpack.c.l.b16 %v1141
    %v1332 = vunpack.c.h.b16 %v1141
    %v1333 = vunpack.c.l.b16 %v1142
    %v1334 = vunpack.c.h.b16 %v1142
    %v1335 = vunpack.c.l.b16 %v1143
    %v1336 = vunpack.c.h.b16 %v1143
    %v1337 = vunpack.c.l.b16 %v1144
    %v1338 = vunpack.c.h.b16 %v1144
    %v1339 = vunpack.c.l.b16 %v1145
    %v1340 = vunpack.c.h.b16 %v1145
    %v1341 = vunpack.c.l.b16 %v1146
    %v1342 = vunpack.c.h.b16 %v1146
    %v1343 = vunpack.c.l.b16 %v1147
    %v1344 = vunpack.c.h.b16 %v1147
    %v1345 = vunpack.c.l.b16 %v1148
    %v1346 = vunpack.c.h.b16 %v1148
    %v1347 = vunpack.c.l.b16 %v1149
    %v1348 = vunpack.c.h.b16 %v1149
    %v1349 = vunpack.c.l.b16 %v1150
    %v1350 = vunpack.c.h.b16 %v1150
    %v1351 = vunpack.c.l.b16 %v1151
    %v1352 = vunpack.c.h.b16 %v1151
    %v1353 = vunpack.c.l.b16 %v1152
    %v1354 = vunpack.c.h.b16 %v1152
    %v1355 = vunpack.c.l.b16 %v1153
    %v1356 = vunpack.c.h.b16 %v1153
    %v1357 = vunpack.c.l.b16 %v1154
    %v1358 = vunpack.c.h.b16 %v1154
    %v1359 = vunpack.c.l.b16 %v1155
    %v1360 = vunpack.c.h.b16 %v1155
    %v1361 = vunpack.c.l.b16 %v1156
    %v1362 = vunpack.c.h.b16 %v1156
    %v1363 = vunpack.c.l.b16 %v1157
    %v1364 = vunpack.c.h.b16 %v1157
    %v1365 = vunpack.c.l.b16 %v1158
    %v1366 = vunpack.c.h.b16 %v1158
    %v1367 = vunpack.c.l.b16 %v1159
    %v1368 = vunpack.c.h.b16 %v1159
    %v1369 = vunpack.c.l.b16 %v1160
    %v1370 = vunpack.c.h.b16 %v1160
    %v1371 = vpack.c.b16 %v1251, %v1243
    %v1372 = vpack.c.b16 %v1252, %v1244
    %v1373 = vpack.c.b16 %v1253, %v1245
    %v1374 = vpack.c.b16 %v1254, %v1246
    %v1375 = vpack.c.b16 %v1255, %v1247
    %v1376 = vpack.c.b16 %v1256, %v1248
    %v1377 = vpack.c.b16 %v1257, %v1249
    %v1378 = vpack.c.b16 %v1258, %v1250
    %v1379 = vpack.c.b16 %v1267, %v1259
    %v1380 = vpack.c.b16 %v1268, %v1260
    %v1381 = vpack.c.b16 %v1269, %v1261
    %v1382 = vpack.c.b16 %v1270, %v1262
    %v1383 = vpack.c.b16 %v1271, %v1263
    %v1384 = vpack.c.b16 %v1272, %v1264
    %v1385 = vpack.c.b16 %v1273, %v1265
    %v1386 = vpack.c.b16 %v1274, %v1266
    %v1387 = vpack.c.b16 %v1283, %v1275
    %v1388 = vpack.c.b16 %v1284, %v1276
    %v1389 = vpack.c.b16 %v1285, %v1277
    %v1390 = vpack.c.b16 %v1286, %v1278
    %v1391 = vpack.c.b16 %v1287, %v1279
    %v1392 = vpack.c.b16 %v1288, %v1280
    %v1393 = vpack.c.b16 %v1289, %v1281
    %v1394 = vpack.c.b16 %v1290, %v1282
    %v1395 = vpack.c.b16 %v1299, %v1291
    %v1396 = vpack.c.b16 %v1300, %v1292
    %v1397 = vpack.c.b16 %v1301, %v1293
    %v1398 = vpack.c.b16 %v1302, %v1294
    %v1399 = vpack.c.b16 %v1303, %v1295
    %v1400 = vpack.c.b16 %v1304, %v1296
    %v1401 = vpack.c.b16 %v1305, %v1297
    %v1402 = vpack.c.b16 %v1306, %v1298
    %v1403 = vpack.c.b16 %v1315, %v1307
    %v1404 = vpack.c.b16 %v1316, %v1308
    %v1405 = vpack.c.b16 %v1317, %v1309
    %v1406 = vpack.c.b16 %v1318, %v1310
    %v1407 = vpack.c.b16 %v1319, %v1311
    %v1408 = vpack.c.b16 %v1320, %v1312
    %v1409 = vpack.c.b16 %v1321, %v1313
    %v1410 = vpack.c.b16 %v1322, %v1314
    %v1411 = vpack.c.b16 %v1331, %v1323
    %v1412 = vpack.c.b16 %v1332, %v1324
    %v1413 = vpack.c.b16 %v1333, %v1325
    %v1414 = vpack.c.b16 %v1334, %v1326
    %v1415 = vpack.c.b16 %v1335, %v1327
    %v1416 = vpack.c.b16 %v1336, %v1328
    %v1417 = vpack.c.b16 %v1337, %v1329
    %v1418 = vpack.c.b16 %v1338, %v1330
    %v1419 = vpack.c.b16 %v1347, %v1339
    %v1420 = vpack.c.b16 %v1348, %v1340
    %v1421 = vpack.c.b16 %v1349, %v1341
    %v1422 = vpack.c.b16 %v1350, %v1342
    %v1423 = vpack.c.b16 %v1351, %v1343
    %v1424 = vpack.c.b16 %v1352, %v1344
    %v1425 = vpack.c.b16 %v1353, %v1345
    %v1426 = vpack.c.b16 %v1354, %v1346
    %v1427 = vpack.c.b16 %v1363, %v1355
    %v1428 = vpack.c.b16 %v1364, %v1356
    %v1429 = vpack.c.b16 %v1365, %v1357
    %v1430 = vpack.c.b16 %v1366, %v1358
    %v1431 = vpack.c.b16 %v1367, %v1359
    %v1432 = vpack.c.b16 %v1368, %v1360
    %v1433 = vpack.c.b16 %v1369, %v1361
    %v1434 = vpack.c.b16 %v1370, %v1362
    %1499 = vmatpush.bf16.msra.mxu0 %v1427
    %1500 = vmatpush.bf16.msra.mxu0 %v1419
    %1501 = vmatpush.bf16.msra.mxu0 %v1411
    %1502 = vmatpush.bf16.msra.mxu0 %v1403
    %1503 = vmatpush.bf16.msra.mxu0 %v1395
    %1504 = vmatpush.bf16.msra.mxu0 %v1387
    %1505 = vmatpush.bf16.msra.mxu0 %v1379
    %1506 = vmatpush.bf16.msra.mxu0 %v1371
    %1507 = vmatmul.bf16.gmra.mxu0 %v1096
    %v1508 = vpop.f32.mrf.mxu0
    %v1509 = vadd.f32 %v1163, %v1508
    %v1510 = vpop.f32.mrf.mxu0
    %v1511 = vadd.f32 %v1163, %v1510
    %1512 = vdwg.mxu0
    %1513 = vmatpush.bf16.msra.mxu0 %v1428
    %1514 = vmatpush.bf16.msra.mxu0 %v1420
    %1515 = vmatpush.bf16.msra.mxu0 %v1412
    %1516 = vmatpush.bf16.msra.mxu0 %v1404
    %1517 = vmatpush.bf16.msra.mxu0 %v1396
    %1518 = vmatpush.bf16.msra.mxu0 %v1388
    %1519 = vmatpush.bf16.msra.mxu0 %v1380
    %1520 = vmatpush.bf16.msra.mxu0 %v1372
    %1521 = vmatmul.bf16.gmra.mxu0 %v1096
    %v1522 = vpop.f32.mrf.mxu0
    %v1523 = vadd.f32 %v1164, %v1522
    %v1524 = vpop.f32.mrf.mxu0
    %v1525 = vadd.f32 %v1164, %v1524
    %1526 = vdwg.mxu0
    %1527 = vmatpush.bf16.msra.mxu0 %v1429
    %1528 = vmatpush.bf16.msra.mxu0 %v1421
    %1529 = vmatpush.bf16.msra.mxu0 %v1413
    %1530 = vmatpush.bf16.msra.mxu0 %v1405
    %1531 = vmatpush.bf16.msra.mxu0 %v1397
    %1532 = vmatpush.bf16.msra.mxu0 %v1389
    %1533 = vmatpush.bf16.msra.mxu0 %v1381
    %1534 = vmatpush.bf16.msra.mxu0 %v1373
    %1535 = vmatmul.bf16.gmra.mxu0 %v1096
    %v1536 = vpop.f32.mrf.mxu0
    %v1537 = vadd.f32 %v1165, %v1536
    %v1538 = vpop.f32.mrf.mxu0
    %v1539 = vadd.f32 %v1165, %v1538
    %1540 = vdwg.mxu0
    %1541 = vmatpush.bf16.msra.mxu0 %v1430
    %1542 = vmatpush.bf16.msra.mxu0 %v1422
    %1543 = vmatpush.bf16.msra.mxu0 %v1414
    %1544 = vmatpush.bf16.msra.mxu0 %v1406
    %1545 = vmatpush.bf16.msra.mxu0 %v1398
    %1546 = vmatpush.bf16.msra.mxu0 %v1390
    %1547 = vmatpush.bf16.msra.mxu0 %v1382
    %1548 = vmatpush.bf16.msra.mxu0 %v1374
    %1549 = vmatmul.bf16.gmra.mxu0 %v1096
    %v1550 = vpop.f32.mrf.mxu0
    %v1551 = vadd.f32 %v1166, %v1550
    %v1552 = vpop.f32.mrf.mxu0
    %v1553 = vadd.f32 %v1166, %v1552
    %1554 = vdwg.mxu0
    %1555 = vmatpush.bf16.msra.mxu0 %v1431
    %1556 = vmatpush.bf16.msra.mxu0 %v1423
    %1557 = vmatpush.bf16.msra.mxu0 %v1415
    %1558 = vmatpush.bf16.msra.mxu0 %v1407
    %1559 = vmatpush.bf16.msra.mxu0 %v1399
    %1560 = vmatpush.bf16.msra.mxu0 %v1391
    %1561 = vmatpush.bf16.msra.mxu0 %v1383
    %1562 = vmatpush.bf16.msra.mxu0 %v1375
    %1563 = vmatmul.bf16.gmra.mxu0 %v1096
    %v1564 = vpop.f32.mrf.mxu0
    %v1565 = vadd.f32 %v1167, %v1564
    %v1566 = vpop.f32.mrf.mxu0
    %v1567 = vadd.f32 %v1167, %v1566
    %1568 = vdwg.mxu0
    %1569 = vmatpush.bf16.msra.mxu0 %v1432
    %1570 = vmatpush.bf16.msra.mxu0 %v1424
    %1571 = vmatpush.bf16.msra.mxu0 %v1416
    %1572 = vmatpush.bf16.msra.mxu0 %v1408
    %1573 = vmatpush.bf16.msra.mxu0 %v1400
    %1574 = vmatpush.bf16.msra.mxu0 %v1392
    %1575 = vmatpush.bf16.msra.mxu0 %v1384
    %1576 = vmatpush.bf16.msra.mxu0 %v1376
    %1577 = vmatmul.bf16.gmra.mxu0 %v1096
    %v1578 = vpop.f32.mrf.mxu0
    %v1579 = vadd.f32 %v1168, %v1578
    %v1580 = vpop.f32.mrf.mxu0
    %v1581 = vadd.f32 %v1168, %v1580
    %1582 = vdwg.mxu0
    %1583 = vmatpush.bf16.msra.mxu0 %v1433
    %1584 = vmatpush.bf16.msra.mxu0 %v1425
    %1585 = vmatpush.bf16.msra.mxu0 %v1417
    %1586 = vmatpush.bf16.msra.mxu0 %v1409
    %1587 = vmatpush.bf16.msra.mxu0 %v1401
    %1588 = vmatpush.bf16.msra.mxu0 %v1393
    %1589 = vmatpush.bf16.msra.mxu0 %v1385
    %1590 = vmatpush.bf16.msra.mxu0 %v1377
    %1591 = vmatmul.bf16.gmra.mxu0 %v1096
    %v1592 = vpop.f32.mrf.mxu0
    %v1593 = vadd.f32 %v1169, %v1592
    %v1594 = vpop.f32.mrf.mxu0
    %v1595 = vadd.f32 %v1169, %v1594
    %1596 = vdwg.mxu0
    %1597 = vmatpush.bf16.msra.mxu0 %v1434
    %1598 = vmatpush.bf16.msra.mxu0 %v1426
    %1599 = vmatpush.bf16.msra.mxu0 %v1418
    %1600 = vmatpush.bf16.msra.mxu0 %v1410
    %1601 = vmatpush.bf16.msra.mxu0 %v1402
    %1602 = vmatpush.bf16.msra.mxu0 %v1394
    %1603 = vmatpush.bf16.msra.mxu0 %v1386
    %1604 = vmatpush.bf16.msra.mxu0 %v1378
    %1605 = vmatmul.bf16.gmra.mxu0 %v1096
    %v1606 = vpop.f32.mrf.mxu0
    %v1607 = vadd.f32 %v1170, %v1606
    %v1608 = vpop.f32.mrf.mxu0
    %v1609 = vadd.f32 %v1170, %v1608
    %1610 = vdwg.mxu0
    %v1611 = vmax.f32 %v1509, 0.0
    %v1612 = vmax.f32 %v1523, 0.0
    %v1613 = vmax.f32 %v1537, 0.0
    %v1614 = vmax.f32 %v1551, 0.0
    %v1615 = vmax.f32 %v1565, 0.0
    %v1616 = vmax.f32 %v1579, 0.0
    %v1617 = vmax.f32 %v1593, 0.0
    %v1618 = vmax.f32 %v1607, 0.0
    %v1619 = vmax.f32 %v1511, 0.0
    %v1620 = vmax.f32 %v1525, 0.0
    %v1621 = vmax.f32 %v1539, 0.0
    %v1622 = vmax.f32 %v1553, 0.0
    %v1623 = vmax.f32 %v1567, 0.0
    %v1624 = vmax.f32 %v1581, 0.0
    %v1625 = vmax.f32 %v1595, 0.0
    %v1626 = vmax.f32 %v1609, 0.0
    %s1627 = smul.u32 4, 128
    %s1628 = smul.u32 %s1627, 1
    %s1629 = sshll.u32 %s1628, 4
    %1630 = dma.done %s150, %s1629
    %v1631 = vpack.c.bf16 %v1619, %v1611
    %v1632 = vpack.c.bf16 %v1620, %v1612
    %v1633 = vpack.c.bf16 %v1621, %v1613
    %v1634 = vpack.c.bf16 %v1622, %v1614
    %v1635 = vpack.c.bf16 %v1623, %v1615
    %v1636 = vpack.c.bf16 %v1624, %v1616
    %v1637 = vpack.c.bf16 %v1625, %v1617
    %v1638 = vpack.c.bf16 %v1626, %v1618
    %v1639 = vld [vmem:[#allocation3] sm:$0xf]
    %v1640 = vld [vmem:[#allocation3 + $0x4] sm:$0xf]
    %v1641 = vld [vmem:[#allocation3 + $0x8] sm:$0xf]
    %v1642 = vld [vmem:[#allocation3 + $0xc] sm:$0xf]
    %v1643 = vld [vmem:[#allocation3 + $0x10] sm:$0xf]
    %v1644 = vld [vmem:[#allocation3 + $0x14] sm:$0xf]
    %v1645 = vld [vmem:[#allocation3 + $0x18] sm:$0xf]
    %v1646 = vld [vmem:[#allocation3 + $0x1c] sm:$0xf]
    %v1647 = vld [vmem:[#allocation3 + $0x20] sm:$0xf]
    %v1648 = vld [vmem:[#allocation3 + $0x24] sm:$0xf]
    %v1649 = vld [vmem:[#allocation3 + $0x28] sm:$0xf]
    %v1650 = vld [vmem:[#allocation3 + $0x2c] sm:$0xf]
    %v1651 = vld [vmem:[#allocation3 + $0x30] sm:$0xf]
    %v1652 = vld [vmem:[#allocation3 + $0x34] sm:$0xf]
    %v1653 = vld [vmem:[#allocation3 + $0x38] sm:$0xf]
    %v1654 = vld [vmem:[#allocation3 + $0x3c] sm:$0xf]
    %v1655 = vld [vmem:[#allocation3 + $0x40] sm:$0xf]
    %v1656 = vld [vmem:[#allocation3 + $0x44] sm:$0xf]
    %v1657 = vld [vmem:[#allocation3 + $0x48] sm:$0xf]
    %v1658 = vld [vmem:[#allocation3 + $0x4c] sm:$0xf]
    %v1659 = vld [vmem:[#allocation3 + $0x50] sm:$0xf]
    %v1660 = vld [vmem:[#allocation3 + $0x54] sm:$0xf]
    %v1661 = vld [vmem:[#allocation3 + $0x58] sm:$0xf]
    %v1662 = vld [vmem:[#allocation3 + $0x5c] sm:$0xf]
    %v1663 = vld [vmem:[#allocation3 + $0x60] sm:$0xf]
    %v1664 = vld [vmem:[#allocation3 + $0x64] sm:$0xf]
    %v1665 = vld [vmem:[#allocation3 + $0x68] sm:$0xf]
    %v1666 = vld [vmem:[#allocation3 + $0x6c] sm:$0xf]
    %v1667 = vld [vmem:[#allocation3 + $0x70] sm:$0xf]
    %v1668 = vld [vmem:[#allocation3 + $0x74] sm:$0xf]
    %v1669 = vld [vmem:[#allocation3 + $0x78] sm:$0xf]
    %v1670 = vld [vmem:[#allocation3 + $0x7c] sm:$0xf]
    %v1671 = vld [vmem:[#allocation3 + $0x80] sm:$0xf]
    %v1672 = vld [vmem:[#allocation3 + $0x84] sm:$0xf]
    %v1673 = vld [vmem:[#allocation3 + $0x88] sm:$0xf]
    %v1674 = vld [vmem:[#allocation3 + $0x8c] sm:$0xf]
    %v1675 = vld [vmem:[#allocation3 + $0x90] sm:$0xf]
    %v1676 = vld [vmem:[#allocation3 + $0x94] sm:$0xf]
    %v1677 = vld [vmem:[#allocation3 + $0x98] sm:$0xf]
    %v1678 = vld [vmem:[#allocation3 + $0x9c] sm:$0xf]
    %v1679 = vld [vmem:[#allocation3 + $0xa0] sm:$0xf]
    %v1680 = vld [vmem:[#allocation3 + $0xa4] sm:$0xf]
    %v1681 = vld [vmem:[#allocation3 + $0xa8] sm:$0xf]
    %v1682 = vld [vmem:[#allocation3 + $0xac] sm:$0xf]
    %v1683 = vld [vmem:[#allocation3 + $0xb0] sm:$0xf]
    %v1684 = vld [vmem:[#allocation3 + $0xb4] sm:$0xf]
    %v1685 = vld [vmem:[#allocation3 + $0xb8] sm:$0xf]
    %v1686 = vld [vmem:[#allocation3 + $0xbc] sm:$0xf]
    %v1687 = vld [vmem:[#allocation3 + $0xc0] sm:$0xf]
    %v1688 = vld [vmem:[#allocation3 + $0xc4] sm:$0xf]
    %v1689 = vld [vmem:[#allocation3 + $0xc8] sm:$0xf]
    %v1690 = vld [vmem:[#allocation3 + $0xcc] sm:$0xf]
    %v1691 = vld [vmem:[#allocation3 + $0xd0] sm:$0xf]
    %v1692 = vld [vmem:[#allocation3 + $0xd4] sm:$0xf]
    %v1693 = vld [vmem:[#allocation3 + $0xd8] sm:$0xf]
    %v1694 = vld [vmem:[#allocation3 + $0xdc] sm:$0xf]
    %v1695 = vld [vmem:[#allocation3 + $0xe0] sm:$0xf]
    %v1696 = vld [vmem:[#allocation3 + $0xe4] sm:$0xf]
    %v1697 = vld [vmem:[#allocation3 + $0xe8] sm:$0xf]
    %v1698 = vld [vmem:[#allocation3 + $0xec] sm:$0xf]
    %v1699 = vld [vmem:[#allocation3 + $0xf0] sm:$0xf]
    %v1700 = vld [vmem:[#allocation3 + $0xf4] sm:$0xf]
    %v1701 = vld [vmem:[#allocation3 + $0xf8] sm:$0xf]
    %v1702 = vld [vmem:[#allocation3 + $0xfc] sm:$0xf]
    %v1703 = vld [vmem:[#allocation3 + $0x100] sm:$0xf]
    %v1704 = vld [vmem:[#allocation3 + $0x104] sm:$0xf]
    %v1705 = vld [vmem:[#allocation3 + $0x108] sm:$0xf]
    %v1706 = vld [vmem:[#allocation3 + $0x10c] sm:$0xf]
    %v1707 = vld [vmem:[#allocation3 + $0x110] sm:$0xf]
    %v1708 = vld [vmem:[#allocation3 + $0x114] sm:$0xf]
    %v1709 = vld [vmem:[#allocation3 + $0x118] sm:$0xf]
    %v1710 = vld [vmem:[#allocation3 + $0x11c] sm:$0xf]
    %v1711 = vld [vmem:[#allocation3 + $0x120] sm:$0xf]
    %v1712 = vld [vmem:[#allocation3 + $0x124] sm:$0xf]
    %v1713 = vld [vmem:[#allocation3 + $0x128] sm:$0xf]
    %v1714 = vld [vmem:[#allocation3 + $0x12c] sm:$0xf]
    %v1715 = vld [vmem:[#allocation3 + $0x130] sm:$0xf]
    %v1716 = vld [vmem:[#allocation3 + $0x134] sm:$0xf]
    %v1717 = vld [vmem:[#allocation3 + $0x138] sm:$0xf]
    %v1718 = vld [vmem:[#allocation3 + $0x13c] sm:$0xf]
    %v1719 = vld [vmem:[#allocation3 + $0x140] sm:$0xf]
    %v1720 = vld [vmem:[#allocation3 + $0x144] sm:$0xf]
    %v1721 = vld [vmem:[#allocation3 + $0x148] sm:$0xf]
    %v1722 = vld [vmem:[#allocation3 + $0x14c] sm:$0xf]
    %v1723 = vld [vmem:[#allocation3 + $0x150] sm:$0xf]
    %v1724 = vld [vmem:[#allocation3 + $0x154] sm:$0xf]
    %v1725 = vld [vmem:[#allocation3 + $0x158] sm:$0xf]
    %v1726 = vld [vmem:[#allocation3 + $0x15c] sm:$0xf]
    %v1727 = vld [vmem:[#allocation3 + $0x160] sm:$0xf]
    %v1728 = vld [vmem:[#allocation3 + $0x164] sm:$0xf]
    %v1729 = vld [vmem:[#allocation3 + $0x168] sm:$0xf]
    %v1730 = vld [vmem:[#allocation3 + $0x16c] sm:$0xf]
    %v1731 = vld [vmem:[#allocation3 + $0x170] sm:$0xf]
    %v1732 = vld [vmem:[#allocation3 + $0x174] sm:$0xf]
    %v1733 = vld [vmem:[#allocation3 + $0x178] sm:$0xf]
    %v1734 = vld [vmem:[#allocation3 + $0x17c] sm:$0xf]
    %v1735 = vld [vmem:[#allocation3 + $0x180] sm:$0xf]
    %v1736 = vld [vmem:[#allocation3 + $0x184] sm:$0xf]
    %v1737 = vld [vmem:[#allocation3 + $0x188] sm:$0xf]
    %v1738 = vld [vmem:[#allocation3 + $0x18c] sm:$0xf]
    %v1739 = vld [vmem:[#allocation3 + $0x190] sm:$0xf]
    %v1740 = vld [vmem:[#allocation3 + $0x194] sm:$0xf]
    %v1741 = vld [vmem:[#allocation3 + $0x198] sm:$0xf]
    %v1742 = vld [vmem:[#allocation3 + $0x19c] sm:$0xf]
    %v1743 = vld [vmem:[#allocation3 + $0x1a0] sm:$0xf]
    %v1744 = vld [vmem:[#allocation3 + $0x1a4] sm:$0xf]
    %v1745 = vld [vmem:[#allocation3 + $0x1a8] sm:$0xf]
    %v1746 = vld [vmem:[#allocation3 + $0x1ac] sm:$0xf]
    %v1747 = vld [vmem:[#allocation3 + $0x1b0] sm:$0xf]
    %v1748 = vld [vmem:[#allocation3 + $0x1b4] sm:$0xf]
    %v1749 = vld [vmem:[#allocation3 + $0x1b8] sm:$0xf]
    %v1750 = vld [vmem:[#allocation3 + $0x1bc] sm:$0xf]
    %v1751 = vld [vmem:[#allocation3 + $0x1c0] sm:$0xf]
    %v1752 = vld [vmem:[#allocation3 + $0x1c4] sm:$0xf]
    %v1753 = vld [vmem:[#allocation3 + $0x1c8] sm:$0xf]
    %v1754 = vld [vmem:[#allocation3 + $0x1cc] sm:$0xf]
    %v1755 = vld [vmem:[#allocation3 + $0x1d0] sm:$0xf]
    %v1756 = vld [vmem:[#allocation3 + $0x1d4] sm:$0xf]
    %v1757 = vld [vmem:[#allocation3 + $0x1d8] sm:$0xf]
    %v1758 = vld [vmem:[#allocation3 + $0x1dc] sm:$0xf]
    %v1759 = vld [vmem:[#allocation3 + $0x1e0] sm:$0xf]
    %v1760 = vld [vmem:[#allocation3 + $0x1e4] sm:$0xf]
    %v1761 = vld [vmem:[#allocation3 + $0x1e8] sm:$0xf]
    %v1762 = vld [vmem:[#allocation3 + $0x1ec] sm:$0xf]
    %v1763 = vld [vmem:[#allocation3 + $0x1f0] sm:$0xf]
    %v1764 = vld [vmem:[#allocation3 + $0x1f4] sm:$0xf]
    %v1765 = vld [vmem:[#allocation3 + $0x1f8] sm:$0xf]
    %v1766 = vld [vmem:[#allocation3 + $0x1fc] sm:$0xf]
    %v1767 = vld [vmem:[#allocation14] sm:$0x1]
    %v1769 = vperm.slane %v1767, 0
    %v1899 = vunpack.c.l.b16 %v1639
    %v1900 = vunpack.c.l.b16 %v1640
    %v1901 = vunpack.c.l.b16 %v1641
    %v1902 = vunpack.c.l.b16 %v1642
    %v1903 = vunpack.c.l.b16 %v1643
    %v1904 = vunpack.c.l.b16 %v1644
    %v1905 = vunpack.c.l.b16 %v1645
    %v1906 = vunpack.c.l.b16 %v1646
    %v1907 = vunpack.c.l.b16 %v1647
    %v1908 = vunpack.c.l.b16 %v1648
    %v1909 = vunpack.c.l.b16 %v1649
    %v1910 = vunpack.c.l.b16 %v1650
    %v1911 = vunpack.c.l.b16 %v1651
    %v1912 = vunpack.c.l.b16 %v1652
    %v1913 = vunpack.c.l.b16 %v1653
    %v1914 = vunpack.c.l.b16 %v1654
    %v1915 = vunpack.c.l.b16 %v1655
    %v1916 = vunpack.c.l.b16 %v1656
    %v1917 = vunpack.c.l.b16 %v1657
    %v1918 = vunpack.c.l.b16 %v1658
    %v1919 = vunpack.c.l.b16 %v1659
    %v1920 = vunpack.c.l.b16 %v1660
    %v1921 = vunpack.c.l.b16 %v1661
    %v1922 = vunpack.c.l.b16 %v1662
    %v1923 = vunpack.c.l.b16 %v1663
    %v1924 = vunpack.c.l.b16 %v1664
    %v1925 = vunpack.c.l.b16 %v1665
    %v1926 = vunpack.c.l.b16 %v1666
    %v1927 = vunpack.c.l.b16 %v1667
    %v1928 = vunpack.c.l.b16 %v1668
    %v1929 = vunpack.c.l.b16 %v1669
    %v1930 = vunpack.c.l.b16 %v1670
    %v1931 = vunpack.c.l.b16 %v1671
    %v1932 = vunpack.c.l.b16 %v1672
    %v1933 = vunpack.c.l.b16 %v1673
    %v1934 = vunpack.c.l.b16 %v1674
    %v1935 = vunpack.c.l.b16 %v1675
    %v1936 = vunpack.c.l.b16 %v1676
    %v1937 = vunpack.c.l.b16 %v1677
    %v1938 = vunpack.c.l.b16 %v1678
    %v1939 = vunpack.c.l.b16 %v1679
    %v1940 = vunpack.c.l.b16 %v1680
    %v1941 = vunpack.c.l.b16 %v1681
    %v1942 = vunpack.c.l.b16 %v1682
    %v1943 = vunpack.c.l.b16 %v1683
    %v1944 = vunpack.c.l.b16 %v1684
    %v1945 = vunpack.c.l.b16 %v1685
    %v1946 = vunpack.c.l.b16 %v1686
    %v1947 = vunpack.c.l.b16 %v1687
    %v1948 = vunpack.c.l.b16 %v1688
    %v1949 = vunpack.c.l.b16 %v1689
    %v1950 = vunpack.c.l.b16 %v1690
    %v1951 = vunpack.c.l.b16 %v1691
    %v1952 = vunpack.c.l.b16 %v1692
    %v1953 = vunpack.c.l.b16 %v1693
    %v1954 = vunpack.c.l.b16 %v1694
    %v1955 = vunpack.c.l.b16 %v1695
    %v1956 = vunpack.c.l.b16 %v1696
    %v1957 = vunpack.c.l.b16 %v1697
    %v1958 = vunpack.c.l.b16 %v1698
    %v1959 = vunpack.c.l.b16 %v1699
    %v1960 = vunpack.c.l.b16 %v1700
    %v1961 = vunpack.c.l.b16 %v1701
    %v1962 = vunpack.c.l.b16 %v1702
    %v1963 = vunpack.c.l.b16 %v1703
    %v1964 = vunpack.c.l.b16 %v1704
    %v1965 = vunpack.c.l.b16 %v1705
    %v1966 = vunpack.c.l.b16 %v1706
    %v1967 = vunpack.c.l.b16 %v1707
    %v1968 = vunpack.c.l.b16 %v1708
    %v1969 = vunpack.c.l.b16 %v1709
    %v1970 = vunpack.c.l.b16 %v1710
    %v1971 = vunpack.c.l.b16 %v1711
    %v1972 = vunpack.c.l.b16 %v1712
    %v1973 = vunpack.c.l.b16 %v1713
    %v1974 = vunpack.c.l.b16 %v1714
    %v1975 = vunpack.c.l.b16 %v1715
    %v1976 = vunpack.c.l.b16 %v1716
    %v1977 = vunpack.c.l.b16 %v1717
    %v1978 = vunpack.c.l.b16 %v1718
    %v1979 = vunpack.c.l.b16 %v1719
    %v1980 = vunpack.c.l.b16 %v1720
    %v1981 = vunpack.c.l.b16 %v1721
    %v1982 = vunpack.c.l.b16 %v1722
    %v1983 = vunpack.c.l.b16 %v1723
    %v1984 = vunpack.c.l.b16 %v1724
    %v1985 = vunpack.c.l.b16 %v1725
    %v1986 = vunpack.c.l.b16 %v1726
    %v1987 = vunpack.c.l.b16 %v1727
    %v1988 = vunpack.c.l.b16 %v1728
    %v1989 = vunpack.c.l.b16 %v1729
    %v1990 = vunpack.c.l.b16 %v1730
    %v1991 = vunpack.c.l.b16 %v1731
    %v1992 = vunpack.c.l.b16 %v1732
    %v1993 = vunpack.c.l.b16 %v1733
    %v1994 = vunpack.c.l.b16 %v1734
    %v1995 = vunpack.c.l.b16 %v1735
    %v1996 = vunpack.c.l.b16 %v1736
    %v1997 = vunpack.c.l.b16 %v1737
    %v1998 = vunpack.c.l.b16 %v1738
    %v1999 = vunpack.c.l.b16 %v1739
    %v2000 = vunpack.c.l.b16 %v1740
    %v2001 = vunpack.c.l.b16 %v1741
    %v2002 = vunpack.c.l.b16 %v1742
    %v2003 = vunpack.c.l.b16 %v1743
    %v2004 = vunpack.c.l.b16 %v1744
    %v2005 = vunpack.c.l.b16 %v1745
    %v2006 = vunpack.c.l.b16 %v1746
    %v2007 = vunpack.c.l.b16 %v1747
    %v2008 = vunpack.c.l.b16 %v1748
    %v2009 = vunpack.c.l.b16 %v1749
    %v2010 = vunpack.c.l.b16 %v1750
    %v2011 = vunpack.c.l.b16 %v1751
    %v2012 = vunpack.c.l.b16 %v1752
    %v2013 = vunpack.c.l.b16 %v1753
    %v2014 = vunpack.c.l.b16 %v1754
    %v2015 = vunpack.c.l.b16 %v1755
    %v2016 = vunpack.c.l.b16 %v1756
    %v2017 = vunpack.c.l.b16 %v1757
    %v2018 = vunpack.c.l.b16 %v1758
    %v2019 = vunpack.c.l.b16 %v1759
    %v2020 = vunpack.c.l.b16 %v1760
    %v2021 = vunpack.c.l.b16 %v1761
    %v2022 = vunpack.c.l.b16 %v1762
    %v2023 = vunpack.c.l.b16 %v1763
    %v2024 = vunpack.c.l.b16 %v1764
    %v2025 = vunpack.c.l.b16 %v1765
    %v2026 = vunpack.c.l.b16 %v1766
    %v2027 = vpack.c.b16 %v1900, %v1899
    %v2028 = vpack.c.b16 %v1902, %v1901
    %v2029 = vpack.c.b16 %v1904, %v1903
    %v2030 = vpack.c.b16 %v1906, %v1905
    %v2031 = vpack.c.b16 %v1908, %v1907
    %v2032 = vpack.c.b16 %v1910, %v1909
    %v2033 = vpack.c.b16 %v1912, %v1911
    %v2034 = vpack.c.b16 %v1914, %v1913
    %v2035 = vpack.c.b16 %v1916, %v1915
    %v2036 = vpack.c.b16 %v1918, %v1917
    %v2037 = vpack.c.b16 %v1920, %v1919
    %v2038 = vpack.c.b16 %v1922, %v1921
    %v2039 = vpack.c.b16 %v1924, %v1923
    %v2040 = vpack.c.b16 %v1926, %v1925
    %v2041 = vpack.c.b16 %v1928, %v1927
    %v2042 = vpack.c.b16 %v1930, %v1929
    %v2043 = vpack.c.b16 %v1932, %v1931
    %v2044 = vpack.c.b16 %v1934, %v1933
    %v2045 = vpack.c.b16 %v1936, %v1935
    %v2046 = vpack.c.b16 %v1938, %v1937
    %v2047 = vpack.c.b16 %v1940, %v1939
    %v2048 = vpack.c.b16 %v1942, %v1941
    %v2049 = vpack.c.b16 %v1944, %v1943
    %v2050 = vpack.c.b16 %v1946, %v1945
    %v2051 = vpack.c.b16 %v1948, %v1947
    %v2052 = vpack.c.b16 %v1950, %v1949
    %v2053 = vpack.c.b16 %v1952, %v1951
    %v2054 = vpack.c.b16 %v1954, %v1953
    %v2055 = vpack.c.b16 %v1956, %v1955
    %v2056 = vpack.c.b16 %v1958, %v1957
    %v2057 = vpack.c.b16 %v1960, %v1959
    %v2058 = vpack.c.b16 %v1962, %v1961
    %v2059 = vpack.c.b16 %v1964, %v1963
    %v2060 = vpack.c.b16 %v1966, %v1965
    %v2061 = vpack.c.b16 %v1968, %v1967
    %v2062 = vpack.c.b16 %v1970, %v1969
    %v2063 = vpack.c.b16 %v1972, %v1971
    %v2064 = vpack.c.b16 %v1974, %v1973
    %v2065 = vpack.c.b16 %v1976, %v1975
    %v2066 = vpack.c.b16 %v1978, %v1977
    %v2067 = vpack.c.b16 %v1980, %v1979
    %v2068 = vpack.c.b16 %v1982, %v1981
    %v2069 = vpack.c.b16 %v1984, %v1983
    %v2070 = vpack.c.b16 %v1986, %v1985
    %v2071 = vpack.c.b16 %v1988, %v1987
    %v2072 = vpack.c.b16 %v1990, %v1989
    %v2073 = vpack.c.b16 %v1992, %v1991
    %v2074 = vpack.c.b16 %v1994, %v1993
    %v2075 = vpack.c.b16 %v1996, %v1995
    %v2076 = vpack.c.b16 %v1998, %v1997
    %v2077 = vpack.c.b16 %v2000, %v1999
    %v2078 = vpack.c.b16 %v2002, %v2001
    %v2079 = vpack.c.b16 %v2004, %v2003
    %v2080 = vpack.c.b16 %v2006, %v2005
    %v2081 = vpack.c.b16 %v2008, %v2007
    %v2082 = vpack.c.b16 %v2010, %v2009
    %v2083 = vpack.c.b16 %v2012, %v2011
    %v2084 = vpack.c.b16 %v2014, %v2013
    %v2085 = vpack.c.b16 %v2016, %v2015
    %v2086 = vpack.c.b16 %v2018, %v2017
    %v2087 = vpack.c.b16 %v2020, %v2019
    %v2088 = vpack.c.b16 %v2022, %v2021
    %v2089 = vpack.c.b16 %v2024, %v2023
    %v2090 = vpack.c.b16 %v2026, %v2025
    %2155 = vmatpush.bf16.msra.mxu0 %v2034
    %2156 = vmatpush.bf16.msra.mxu0 %v2033
    %2157 = vmatpush.bf16.msra.mxu0 %v2032
    %2158 = vmatpush.bf16.msra.mxu0 %v2031
    %2159 = vmatpush.bf16.msra.mxu0 %v2030
    %2160 = vmatpush.bf16.msra.mxu0 %v2029
    %2161 = vmatpush.bf16.msra.mxu0 %v2028
    %2162 = vmatpush.bf16.msra.mxu0 %v2027
    %2163 = vmatmul.bf16.gmra.mxu0 %v1631
    %v2164 = vpop.f32.mrf.mxu0
    %v2165 = vadd.f32 %v1769, %v2164
    %v2166 = vpop.f32.mrf.mxu0
    %v2167 = vadd.f32 %v1769, %v2166
    %2168 = vdwg.mxu0
    %2169 = vmatpush.bf16.msra.mxu0 %v2042
    %2170 = vmatpush.bf16.msra.mxu0 %v2041
    %2171 = vmatpush.bf16.msra.mxu0 %v2040
    %2172 = vmatpush.bf16.msra.mxu0 %v2039
    %2173 = vmatpush.bf16.msra.mxu0 %v2038
    %2174 = vmatpush.bf16.msra.mxu0 %v2037
    %2175 = vmatpush.bf16.msra.mxu0 %v2036
    %2176 = vmatpush.bf16.msra.mxu0 %v2035
    %2177 = vmatmul.bf16.gmra.mxu0 %v1632
    %v2178 = vpop.f32.mrf.mxu0
    %v2179 = vadd.f32 %v2165, %v2178
    %v2180 = vpop.f32.mrf.mxu0
    %v2181 = vadd.f32 %v2167, %v2180
    %2182 = vdwg.mxu0
    %2183 = vmatpush.bf16.msra.mxu0 %v2050
    %2184 = vmatpush.bf16.msra.mxu0 %v2049
    %2185 = vmatpush.bf16.msra.mxu0 %v2048
    %2186 = vmatpush.bf16.msra.mxu0 %v2047
    %2187 = vmatpush.bf16.msra.mxu0 %v2046
    %2188 = vmatpush.bf16.msra.mxu0 %v2045
    %2189 = vmatpush.bf16.msra.mxu0 %v2044
    %2190 = vmatpush.bf16.msra.mxu0 %v2043
    %2191 = vmatmul.bf16.gmra.mxu0 %v1633
    %v2192 = vpop.f32.mrf.mxu0
    %v2193 = vadd.f32 %v2179, %v2192
    %v2194 = vpop.f32.mrf.mxu0
    %v2195 = vadd.f32 %v2181, %v2194
    %2196 = vdwg.mxu0
    %2197 = vmatpush.bf16.msra.mxu0 %v2058
    %2198 = vmatpush.bf16.msra.mxu0 %v2057
    %2199 = vmatpush.bf16.msra.mxu0 %v2056
    %2200 = vmatpush.bf16.msra.mxu0 %v2055
    %2201 = vmatpush.bf16.msra.mxu0 %v2054
    %2202 = vmatpush.bf16.msra.mxu0 %v2053
    %2203 = vmatpush.bf16.msra.mxu0 %v2052
    %2204 = vmatpush.bf16.msra.mxu0 %v2051
    %2205 = vmatmul.bf16.gmra.mxu0 %v1634
    %v2206 = vpop.f32.mrf.mxu0
    %v2207 = vadd.f32 %v2193, %v2206
    %v2208 = vpop.f32.mrf.mxu0
    %v2209 = vadd.f32 %v2195, %v2208
    %2210 = vdwg.mxu0
    %2211 = vmatpush.bf16.msra.mxu0 %v2066
    %2212 = vmatpush.bf16.msra.mxu0 %v2065
    %2213 = vmatpush.bf16.msra.mxu0 %v2064
    %2214 = vmatpush.bf16.msra.mxu0 %v2063
    %2215 = vmatpush.bf16.msra.mxu0 %v2062
    %2216 = vmatpush.bf16.msra.mxu0 %v2061
    %2217 = vmatpush.bf16.msra.mxu0 %v2060
    %2218 = vmatpush.bf16.msra.mxu0 %v2059
    %2219 = vmatmul.bf16.gmra.mxu0 %v1635
    %v2220 = vpop.f32.mrf.mxu0
    %v2221 = vadd.f32 %v2207, %v2220
    %v2222 = vpop.f32.mrf.mxu0
    %v2223 = vadd.f32 %v2209, %v2222
    %2224 = vdwg.mxu0
    %2225 = vmatpush.bf16.msra.mxu0 %v2074
    %2226 = vmatpush.bf16.msra.mxu0 %v2073
    %2227 = vmatpush.bf16.msra.mxu0 %v2072
    %2228 = vmatpush.bf16.msra.mxu0 %v2071
    %2229 = vmatpush.bf16.msra.mxu0 %v2070
    %2230 = vmatpush.bf16.msra.mxu0 %v2069
    %2231 = vmatpush.bf16.msra.mxu0 %v2068
    %2232 = vmatpush.bf16.msra.mxu0 %v2067
    %2233 = vmatmul.bf16.gmra.mxu0 %v1636
    %v2234 = vpop.f32.mrf.mxu0
    %v2235 = vadd.f32 %v2221, %v2234
    %v2236 = vpop.f32.mrf.mxu0
    %v2237 = vadd.f32 %v2223, %v2236
    %2238 = vdwg.mxu0
    %2239 = vmatpush.bf16.msra.mxu0 %v2082
    %2240 = vmatpush.bf16.msra.mxu0 %v2081
    %2241 = vmatpush.bf16.msra.mxu0 %v2080
    %2242 = vmatpush.bf16.msra.mxu0 %v2079
    %2243 = vmatpush.bf16.msra.mxu0 %v2078
    %2244 = vmatpush.bf16.msra.mxu0 %v2077
    %2245 = vmatpush.bf16.msra.mxu0 %v2076
    %2246 = vmatpush.bf16.msra.mxu0 %v2075
    %2247 = vmatmul.bf16.gmra.mxu0 %v1637
    %v2248 = vpop.f32.mrf.mxu0
    %v2249 = vadd.f32 %v2235, %v2248
    %v2250 = vpop.f32.mrf.mxu0
    %v2251 = vadd.f32 %v2237, %v2250
    %2252 = vdwg.mxu0
    %2253 = vmatpush.bf16.msra.mxu0 %v2090
    %2254 = vmatpush.bf16.msra.mxu0 %v2089
    %2255 = vmatpush.bf16.msra.mxu0 %v2088
    %2256 = vmatpush.bf16.msra.mxu0 %v2087
    %2257 = vmatpush.bf16.msra.mxu0 %v2086
    %2258 = vmatpush.bf16.msra.mxu0 %v2085
    %2259 = vmatpush.bf16.msra.mxu0 %v2084
    %2260 = vmatpush.bf16.msra.mxu0 %v2083
    %2261 = vmatmul.bf16.gmra.mxu0 %v1638
    %v2262 = vpop.f32.mrf.mxu0
    %v2263 = vadd.f32 %v2249, %v2262
    %v2264 = vpop.f32.mrf.mxu0
    %v2265 = vadd.f32 %v2251, %v2264
    %2266 = vdwg.mxu0
    %v2267 = vadd.f32 %v1090, %v2263
    %v2268 = vadd.f32 %v1091, %v2265
    %v2269 = vld [vmem:[%s10] sm:$0x1]
    %v2270 = vld [vmem:[%s11] sm:$0x1]
    %2271 = vadd.xlane.f32.xlu0 %v2267
    %v2272 = vpop.xlane.xlu0 %2271
    %2273 = vadd.xlane.f32.xlu0 %v2268
    %v2274 = vpop.xlane.xlu0 %2273
    %v2275 = vmul.f32 %v2272, %v1045
    %v2276 = vmul.f32 %v2274, %v1045
    %v2277 = vsub.f32 %v2267, %v2275
    %v2278 = vsub.f32 %v2268, %v2276
    %v2279 = vmul.f32 %v2277, %v2277
    %v2280 = vmul.f32 %v2278, %v2278
    %2281 = vadd.xlane.f32.xlu0 %v2279
    %v2282 = vpop.xlane.xlu0 %2281
    %2283 = vadd.xlane.f32.xlu0 %v2280
    %v2284 = vpop.xlane.xlu0 %2283
    %v2285 = vmul.f32 %v2282, %v1045
    %v2286 = vmul.f32 %v2284, %v1045
    %v2287 = vadd.f32 %v2285, 1e-05
    %v2288 = vadd.f32 %v2286, 1e-05
    %v2289 = vrsqrt.pop %v2287
    %v2290 = vmul.f32 %v2289, %v2287
    %v2291 = vmul.f32 %v2290, %v2289
    %v2292 = vmul.f32 0.5, %v2291
    %v2293 = vsub.f32 1.5, %v2292
    %v2294 = vmul.f32 %v2289, %v2293
    %vm2295 = vweird.f32 %v2287
    %vm2296 = vweird.f32 %v2289
    %vm2297 = vmor %vm2295, %vm2296
    %v2298 = vsel %vm2297, %v2289, %v2294
    %v2299 = vrsqrt.pop %v2288
    %v2300 = vmul.f32 %v2299, %v2288
    %v2301 = vmul.f32 %v2300, %v2299
    %v2302 = vmul.f32 0.5, %v2301
    %v2303 = vsub.f32 1.5, %v2302
    %v2304 = vmul.f32 %v2299, %v2303
    %vm2305 = vweird.f32 %v2288
    %vm2306 = vweird.f32 %v2299
    %vm2307 = vmor %vm2305, %vm2306
    %v2308 = vsel %vm2307, %v2299, %v2304
    %v2309 = vmul.f32 %v2277, %v2298
    %v2310 = vmul.f32 %v2278, %v2308
    %v2312 = vperm.slane %v2269, 0
    %v2314 = vmul.f32 %v2309, %v2312
    %v2315 = vmul.f32 %v2310, %v2312
    %v2317 = vperm.slane %v2270, 0
    %v2319 = vadd.f32 %v2314, %v2317
    %v2320 = vadd.f32 %v2315, %v2317
    %2321 = vst [vmem:[#allocation16] sm:$0xff] %v2319
    %2322 = vst [vmem:[#allocation16 + $0x8] sm:$0xff] %v2320
    // Predicated region
    $region82: #{encoder_layer.1} parent=1 // pred_check
      _
    $region83: #{encoder_layer.1} parent=1 // pred_check_branch
      %2324 = sbr.rel (0) target = $region85
    $region84: #{encoder_layer.1} parent=1 // pred_region
      %2326 = vsyncadd [#allocation7], 0
      %s2327 = sshll.u32 [#allocation16], 4
      %s2328 = int_to_ptr.vmem [resolvable:$true] %s2327
      %s2329 = sshll.u32 %s14, 4
      %s2330 = int_to_ptr.hbm [resolvable:$true] %s2329
      %2335 = dma.vmem_to_hbm [thread:$0]  %s2328, 256, %s2330, [#allocation7], 128, 128, 8
    $region85: #{encoder_layer.1} parent=1 // pred_fallthru
      _
    // Predicated region
    $region86: #{encoder_layer.1} parent=1 // pred_check
      _
    $region87: #{encoder_layer.1} parent=1 // pred_check_branch
      %2337 = sbr.rel (0) target = $region89
    $region88: #{encoder_layer.1} parent=1 // pred_region
      _
    $region89: #{encoder_layer.1} parent=1 // pred_fallthru
      _
    // Predicated region
    $region90: #{encoder_layer.1} parent=1 // pred_check
      _
    $region91: #{encoder_layer.1} parent=1 // pred_check_branch
      %2339 = sbr.rel (0) target = $region93
    $region92: #{encoder_layer.1} parent=1 // pred_region
      %2341 = dma.done [#allocation7], 256
    $region93: #{encoder_layer.1} parent=1 // pred_fallthru
      _
    // Predicated region
    $region94: #{encoder_layer.1} parent=1 // pred_check
      _
    $region95: #{encoder_layer.1} parent=1 // pred_check_branch
      %2343 = sbr.rel (0) target = $region97
    $region96: #{encoder_layer.1} parent=1 // pred_region
      _
    $region97: #{encoder_layer.1} parent=1 // pred_fallthru
      _
    %2344 = vsyncpa [#allocation6], 1
    %2345 = vsyncpa [#allocation9], 1
    %2346 = vsyncpa [#allocation12], 1
    %2347 = vsyncpa [#allocation15], 1
    %2348 = vsyncpa [#allocation7], 1
  %2349 = vsyncmov [#allocation4]
  %s2350 = vpop.sfrf %2349
  %p2351 = scmp.eq.s32.totalorder %s2350, 0
  %p2352 = pneg %p2351
  %2354 = shalt.err (%p2352)
  %s2355 = scalar_lea.sflag [#allocation4], 1
  %2356 = vsyncmov %s2355
  %s2357 = vpop.sfrf %2356
  %p2358 = scmp.eq.s32.totalorder %s2357, 0
  %p2359 = pneg %p2358
  %2361 = shalt.err (%p2359)

</llo_original>
